<compile_context>
chip_gen: v5e
topology: v5e:2x2
jax: 0.10.0
libtpu: 0.0.40
codegen_flags: <defaults>
</compile_context>

<pallas_src>
import functools

import jax
import jax.numpy as jnp
from jax.experimental import pallas as pl
from jax.experimental.pallas import tpu as pltpu

HIDDEN = 128   # hidden_nodes in the PyTorch module
LANES = 128    # TPU lane width; width of the packed output slab


def _round_up(x, m):
    return ((x + m - 1) // m) * m


def _a3c_kernel(x_ref, wb_ref, bb_ref, w12_ref, b12_ref, w2_ref, b2_ref,
                out_ref, *, n_outputs):
    # ---- body: Linear(n_in, 128) + ReLU (bf16 MXU inputs, f32 accumulation) ----
    x = x_ref[...]
    h = jnp.dot(x.astype(jnp.bfloat16), wb_ref[...],
                preferred_element_type=jnp.float32) + bb_ref[...]
    h = jnp.maximum(h, 0.0)

    # ---- fused first layers of both heads: one (128 -> 256) matmul ----
    h12 = jnp.dot(h.astype(jnp.bfloat16), w12_ref[...],
                  preferred_element_type=jnp.float32) + b12_ref[...]
    h12 = jnp.maximum(h12, 0.0)          # lanes 0..127 policy hidden, 128..255 value hidden

    # ---- fused second layers of both heads: one (256 -> 128) matmul ----
    # z lanes 0..n_out-1 = policy logits, lane n_out = value (bv2 folded into bias),
    # lanes > n_out = 0 (zero weight columns, zero bias).
    z = jnp.dot(h12.astype(jnp.bfloat16), w2_ref[...],
                preferred_element_type=jnp.float32) + b2_ref[...]

    lane = jax.lax.broadcasted_iota(jnp.int32, z.shape, 1)

    # Softmax over the real policy lanes only: mask lanes >= n_out to -1e30 so
    # their exp underflows to exactly 0 (real logits are always finite here).
    logits = jnp.where(lane < n_outputs, z, jnp.float32(-1e30))
    m = jnp.max(logits, axis=-1, keepdims=True)
    e = jnp.exp(logits - m)
    s = jnp.sum(e, axis=-1, keepdims=True)
    r = pl.reciprocal(s, approx=True)      # EUP vrcp (free bundle slot)
    r = r * (2.0 - s * r)                  # one Newton step -> ~f32 accuracy
    probs = e * r                          # lanes >= n_out are exactly 0

    # Packed slab: probs in lanes 0..n_out-1, value in lane n_out, 0 elsewhere.
    value_col = jnp.where(lane == n_outputs, z, 0.0)
    out_ref[...] = probs + value_col


def a3c_forward(state, p, n_outputs, *, num_cores=1, max_tile=1024):
    """state: (B, n_inputs) f32.  p: packed params from pack_params().

    num_cores: set to 2 on v7x so the grid keeps >= 2 parallel steps (one per TC).
    """
    B, n_inputs = state.shape

    # Pick the largest batch tile (fewest grid steps) while keeping the grid
    # length a multiple of num_cores so "parallel" can shard across TCs on v7x.
    tiles = max(num_cores, pl.cdiv(B, max_tile))
    tiles = _round_up(tiles, num_cores)
    bt = _round_up(pl.cdiv(B, tiles), 8)
    grid = (pl.cdiv(B, bt),)

    def batch_spec(shape):
        return pl.BlockSpec(shape, lambda i: (i, 0))

    def resident_spec(arr):                # constant index_map -> weights stay resident
        return pl.BlockSpec(arr.shape, lambda i: (0, 0))

    args = (state, p["wb"], p["bb"], p["w12"], p["b12"], p["w2"], p["b2"])

    weight_bytes = sum(int(a.size) * a.dtype.itemsize for a in args[1:])
    cost = pl.CostEstimate(
        flops=2 * B * (n_inputs * HIDDEN + HIDDEN * 2 * HIDDEN + 2 * HIDDEN * LANES),
        transcendentals=B * LANES,                                   # softmax exp
        bytes_accessed=B * (n_inputs + LANES) * 4 + weight_bytes,
    )

    out = pl.pallas_call(
        functools.partial(_a3c_kernel, n_outputs=n_outputs),
        out_shape=jax.ShapeDtypeStruct((B, LANES), jnp.float32),
        grid=grid,
        in_specs=[batch_spec((bt, n_inputs))] + [resident_spec(a) for a in args[1:]],
        out_specs=batch_spec((bt, LANES)),
        compiler_params=pltpu.CompilerParams(
            dimension_semantics=("parallel",)),   # v7x: shard batch over both TCs
        cost_estimate=cost,
    )(*args)

    probs = out[:, :n_outputs]
    value = out[:, n_outputs:n_outputs + 1]
    return probs, value


def init_params(key, n_inputs, n_outputs, hidden=HIDDEN):
    """Deterministic init mimicking PyTorch Linear default (U[-1/sqrt(fan_in), +])."""
    def linear(k, fan_in, fan_out):
        kw, kb = jax.random.split(k)
        bound = 1.0 / jnp.sqrt(jnp.float32(fan_in))
        w = jax.random.uniform(kw, (fan_in, fan_out), jnp.float32, -bound, bound)
        b = jax.random.uniform(kb, (1, fan_out), jnp.float32, -bound, bound)
        return w, b

    k = jax.random.split(key, 5)
    wb, bb = linear(k[0], n_inputs, hidden)
    wp1, bp1 = linear(k[1], hidden, hidden)
    wp2, bp2 = linear(k[2], hidden, n_outputs)
    wv1, bv1 = linear(k[3], hidden, hidden)
    wv2, bv2 = linear(k[4], hidden, 1)
    return dict(wb=wb, bb=bb, wp1=wp1, bp1=bp1, wp2=wp2, bp2=bp2,
                wv1=wv1, bv1=bv1, wv2=wv2, bv2=bv2)


def pack_params(p, n_outputs, hidden=HIDDEN):
    """Fuse/pad/cast the torch-style params into the kernel's layout."""
    assert n_outputs < LANES, "packed output slab requires n_outputs < 128"

    # Fused second-layer weight (2*hidden, LANES):
    #   rows 0..hidden-1   -> Wp2 into lanes 0..n_out-1 (policy logits)
    #   rows hidden..2h-1  -> Wv2 into lane n_out       (value)
    w2 = jnp.zeros((2 * hidden, LANES), jnp.float32)
    w2 = w2.at[:hidden, :n_outputs].set(p["wp2"])
    w2 = w2.at[hidden:, n_outputs].set(p["wv2"][:, 0])
    b2 = jnp.zeros((1, LANES), jnp.float32)
    b2 = b2.at[:, :n_outputs].set(p["bp2"][0])
    b2 = b2.at[:, n_outputs].set(p["bv2"][0, 0])

    return dict(
        wb=p["wb"].astype(jnp.bfloat16),                                         # (n_in, 128)
        bb=p["bb"],                                                              # f32 (1, 128)
        w12=jnp.concatenate([p["wp1"], p["wv1"]], axis=1).astype(jnp.bfloat16),  # (128, 256)
        b12=jnp.concatenate([p["bp1"], p["bv1"]], axis=1),                       # f32 (1, 256)
        w2=w2.astype(jnp.bfloat16),                                              # (256, 128)
        b2=b2,                                                                   # f32 (1, 128)
    )


def reference_forward(state, pk, n_outputs):
    """Pure-JAX mirror of the kernel math (same bf16 casts, f32 accumulation)."""
    h = jnp.maximum(jnp.dot(state.astype(jnp.bfloat16), pk["wb"],
                            preferred_element_type=jnp.float32) + pk["bb"], 0.0)
    h12 = jnp.maximum(jnp.dot(h.astype(jnp.bfloat16), pk["w12"],
                              preferred_element_type=jnp.float32) + pk["b12"], 0.0)
    z = jnp.dot(h12.astype(jnp.bfloat16), pk["w2"],
                preferred_element_type=jnp.float32) + pk["b2"]
    probs = jax.nn.softmax(z[:, :n_outputs], axis=-1)
    value = z[:, n_outputs:n_outputs + 1]
    return probs, value


if __name__ == "__main__":
    B, N_INPUTS, N_OUTPUTS = 256, 16, 8   # single grid step (bt=256) on 1-TC chips

    key = jax.random.PRNGKey(0)
    k_state, k_params = jax.random.split(key)
    state = jax.random.normal(k_state, (B, N_INPUTS), jnp.float32)
    params = init_params(k_params, N_INPUTS, N_OUTPUTS)
    packed = pack_params(params, N_OUTPUTS)

    fwd = jax.jit(functools.partial(a3c_forward, n_outputs=N_OUTPUTS))
    probs, value = jax.block_until_ready(fwd(state, packed))

    # correctness vs a pure-JAX reference that mirrors the kernel's dtypes
    # (bf16 weights; drift vs the original f32 PyTorch net is ~1e-2 on logits
    #  — fine for acting/inference; keep an f32 path if gradients need it)
    probs_ref, value_ref = reference_forward(state, packed, N_OUTPUTS)
    assert probs.shape == (B, N_OUTPUTS) and value.shape == (B, 1)
    assert jnp.allclose(probs, probs_ref, atol=1e-4, rtol=1e-4)
    assert jnp.allclose(value, value_ref, atol=1e-4, rtol=1e-4)
    assert jnp.allclose(jnp.sum(probs, axis=-1), 1.0, atol=1e-4)

    print("KERNEL_OK")
</pallas_src>

<mosaic_0001>
module attributes {stable_mosaic.version = 11 : i64} {
  func.func @_a3c_kernel(%arg0: i32, %arg1: memref<256x16xf32, #tpu.memory_space<vmem>>, %arg2: memref<16x128xbf16, #tpu.memory_space<vmem>>, %arg3: memref<1x128xf32, #tpu.memory_space<vmem>>, %arg4: memref<128x256xbf16, #tpu.memory_space<vmem>>, %arg5: memref<1x256xf32, #tpu.memory_space<vmem>>, %arg6: memref<256x128xbf16, #tpu.memory_space<vmem>>, %arg7: memref<1x128xf32, #tpu.memory_space<vmem>>, %arg8: memref<256x128xf32, #tpu.memory_space<vmem>>) attributes {dimension_semantics = [#tpu.dimension_semantics<parallel>], iteration_bounds = array<i64: 1>, scalar_prefetch = 0 : i64, scratch_operands = 0 : i64, tpu.core_type = #tpu.core_type<tc>, window_params = [{transform_indices = @transform_0, window_bounds = array<i64: 256, 16>}, {pipeline_mode = #tpu.pipeline_mode<synchronous>, transform_indices = @transform_1, window_bounds = array<i64: 16, 128>}, {pipeline_mode = #tpu.pipeline_mode<synchronous>, transform_indices = @transform_2, window_bounds = array<i64: 1, 128>}, {pipeline_mode = #tpu.pipeline_mode<synchronous>, transform_indices = @transform_3, window_bounds = array<i64: 128, 256>}, {pipeline_mode = #tpu.pipeline_mode<synchronous>, transform_indices = @transform_4, window_bounds = array<i64: 1, 256>}, {pipeline_mode = #tpu.pipeline_mode<synchronous>, transform_indices = @transform_5, window_bounds = array<i64: 256, 128>}, {pipeline_mode = #tpu.pipeline_mode<synchronous>, transform_indices = @transform_6, window_bounds = array<i64: 1, 128>}, {transform_indices = @transform_7, window_bounds = array<i64: 256, 128>}]} {
    %c0 = arith.constant 0 : index
    %c0_0 = arith.constant 0 : index
    %0 = vector.load %arg1[%c0, %c0_0] : memref<256x16xf32, #tpu.memory_space<vmem>>, vector<256x16xf32>
    %1 = arith.truncf %0 : vector<256x16xf32> to vector<256x16xbf16>
    %c0_1 = arith.constant 0 : index
    %c0_2 = arith.constant 0 : index
    %2 = vector.load %arg2[%c0_1, %c0_2] : memref<16x128xbf16, #tpu.memory_space<vmem>>, vector<16x128xbf16>
    %cst = arith.constant dense<0.000000e+00> : vector<256x128xf32>
    %3 = tpu.matmul %1, %2, %cst {dimension_numbers = #tpu.dot_dimension_numbers<[1], [0], [0], [1], [0, 0, 1, 1], [], []>} : vector<256x16xbf16>, vector<16x128xbf16>, vector<256x128xf32> -> vector<256x128xf32>
    %c0_3 = arith.constant 0 : index
    %c0_4 = arith.constant 0 : index
    %4 = vector.load %arg3[%c0_3, %c0_4] : memref<1x128xf32, #tpu.memory_space<vmem>>, vector<1x128xf32>
    %5 = vector.broadcast %4 : vector<1x128xf32> to vector<256x128xf32>
    %6 = arith.addf %3, %5 : vector<256x128xf32>
    %cst_5 = arith.constant 0.000000e+00 : f32
    %7 = vector.broadcast %cst_5 : f32 to vector<256x128xf32>
    %8 = arith.maximumf %6, %7 : vector<256x128xf32>
    %9 = arith.truncf %8 : vector<256x128xf32> to vector<256x128xbf16>
    %c0_6 = arith.constant 0 : index
    %c0_7 = arith.constant 0 : index
    %10 = vector.load %arg4[%c0_6, %c0_7] : memref<128x256xbf16, #tpu.memory_space<vmem>>, vector<128x256xbf16>
    %cst_8 = arith.constant dense<0.000000e+00> : vector<256x256xf32>
    %11 = tpu.matmul %9, %10, %cst_8 {dimension_numbers = #tpu.dot_dimension_numbers<[1], [0], [0], [1], [0, 0, 1, 1], [], []>} : vector<256x128xbf16>, vector<128x256xbf16>, vector<256x256xf32> -> vector<256x256xf32>
    %c0_9 = arith.constant 0 : index
    %c0_10 = arith.constant 0 : index
    %12 = vector.load %arg5[%c0_9, %c0_10] : memref<1x256xf32, #tpu.memory_space<vmem>>, vector<1x256xf32>
    %13 = vector.broadcast %12 : vector<1x256xf32> to vector<256x256xf32>
    %14 = arith.addf %11, %13 : vector<256x256xf32>
    %cst_11 = arith.constant 0.000000e+00 : f32
    %15 = vector.broadcast %cst_11 : f32 to vector<256x256xf32>
    %16 = arith.maximumf %14, %15 : vector<256x256xf32>
    %17 = arith.truncf %16 : vector<256x256xf32> to vector<256x256xbf16>
    %c0_12 = arith.constant 0 : index
    %c0_13 = arith.constant 0 : index
    %18 = vector.load %arg6[%c0_12, %c0_13] : memref<256x128xbf16, #tpu.memory_space<vmem>>, vector<256x128xbf16>
    %cst_14 = arith.constant dense<0.000000e+00> : vector<256x128xf32>
    %19 = tpu.matmul %17, %18, %cst_14 {dimension_numbers = #tpu.dot_dimension_numbers<[1], [0], [0], [1], [0, 0, 1, 1], [], []>} : vector<256x256xbf16>, vector<256x128xbf16>, vector<256x128xf32> -> vector<256x128xf32>
    %c0_15 = arith.constant 0 : index
    %c0_16 = arith.constant 0 : index
    %20 = vector.load %arg7[%c0_15, %c0_16] : memref<1x128xf32, #tpu.memory_space<vmem>>, vector<1x128xf32>
    %21 = vector.broadcast %20 : vector<1x128xf32> to vector<256x128xf32>
    %22 = arith.addf %19, %21 : vector<256x128xf32>
    %23 = tpu.iota {dimensions = array<i32: 1>} : vector<256x128xi32>
    %c8_i32 = arith.constant 8 : i32
    %24 = vector.broadcast %c8_i32 : i32 to vector<256x128xi32>
    %25 = arith.cmpi slt, %23, %24 : vector<256x128xi32>
    %cst_17 = arith.constant -1.000000e+30 : f32
    %26 = vector.broadcast %cst_17 : f32 to vector<256x128xf32>
    %27 = arith.select %25, %22, %26 : vector<256x128xi1>, vector<256x128xf32>
    %cst_18 = arith.constant dense<0xFF800000> : vector<256xf32>
    %28 = vector.multi_reduction <maximumf>, %27, %cst_18 [1] : vector<256x128xf32> to vector<256xf32>
    %29 = vector.shape_cast %28 : vector<256xf32> to vector<256x1xf32>
    %30 = vector.broadcast %29 : vector<256x1xf32> to vector<256x128xf32>
    %31 = arith.subf %27, %30 : vector<256x128xf32>
    %32 = math.exp %31 : vector<256x128xf32>
    %cst_19 = arith.constant dense<0.000000e+00> : vector<256xf32>
    %33 = vector.multi_reduction <add>, %32, %cst_19 [1] : vector<256x128xf32> to vector<256xf32>
    %34 = vector.shape_cast %33 : vector<256xf32> to vector<256x1xf32>
    %35 = tpu.reciprocal %34 {approx = true} : vector<256x1xf32> -> vector<256x1xf32>
    %36 = arith.mulf %34, %35 : vector<256x1xf32>
    %cst_20 = arith.constant 2.000000e+00 : f32
    %37 = vector.broadcast %cst_20 : f32 to vector<256x1xf32>
    %38 = arith.subf %37, %36 : vector<256x1xf32>
    %39 = arith.mulf %35, %38 : vector<256x1xf32>
    %40 = vector.broadcast %39 : vector<256x1xf32> to vector<256x128xf32>
    %41 = arith.mulf %32, %40 : vector<256x128xf32>
    %c8_i32_21 = arith.constant 8 : i32
    %42 = vector.broadcast %c8_i32_21 : i32 to vector<256x128xi32>
    %43 = arith.cmpi eq, %23, %42 : vector<256x128xi32>
    %cst_22 = arith.constant 0.000000e+00 : f32
    %44 = vector.broadcast %cst_22 : f32 to vector<256x128xf32>
    %45 = arith.select %43, %22, %44 : vector<256x128xi1>, vector<256x128xf32>
    %46 = arith.addf %41, %45 : vector<256x128xf32>
    %c0_23 = arith.constant 0 : index
    %c0_24 = arith.constant 0 : index
    %47 = vector.load %arg8[%c0_23, %c0_24] : memref<256x128xf32, #tpu.memory_space<vmem>>, vector<256x128xf32>
    tpu.vector_store %arg8[%c0_23, %c0_24], %46 {strides = array<i32>} : memref<256x128xf32, #tpu.memory_space<vmem>>, vector<256x128xf32>,
    return
  }
  func.func @transform_0(%arg0: i32) -> (i32, i32) {
    %c0_i32 = arith.constant 0 : i32
    %c0_i32_0 = arith.constant 0 : i32
    return %arg0, %c0_i32 : i32, i32
  }
  func.func @transform_1(%arg0: i32) -> (i32, i32) {
    %c0_i32 = arith.constant 0 : i32
    %c0_i32_0 = arith.constant 0 : i32
    %c0_i32_1 = arith.constant 0 : i32
    return %c0_i32, %c0_i32_0 : i32, i32
  }
  func.func @transform_2(%arg0: i32) -> (i32, i32) {
    %c0_i32 = arith.constant 0 : i32
    %c0_i32_0 = arith.constant 0 : i32
    %c0_i32_1 = arith.constant 0 : i32
    return %c0_i32, %c0_i32_0 : i32, i32
  }
  func.func @transform_3(%arg0: i32) -> (i32, i32) {
    %c0_i32 = arith.constant 0 : i32
    %c0_i32_0 = arith.constant 0 : i32
    %c0_i32_1 = arith.constant 0 : i32
    return %c0_i32, %c0_i32_0 : i32, i32
  }
  func.func @transform_4(%arg0: i32) -> (i32, i32) {
    %c0_i32 = arith.constant 0 : i32
    %c0_i32_0 = arith.constant 0 : i32
    %c0_i32_1 = arith.constant 0 : i32
    return %c0_i32, %c0_i32_0 : i32, i32
  }
  func.func @transform_5(%arg0: i32) -> (i32, i32) {
    %c0_i32 = arith.constant 0 : i32
    %c0_i32_0 = arith.constant 0 : i32
    %c0_i32_1 = arith.constant 0 : i32
    return %c0_i32, %c0_i32_0 : i32, i32
  }
  func.func @transform_6(%arg0: i32) -> (i32, i32) {
    %c0_i32 = arith.constant 0 : i32
    %c0_i32_0 = arith.constant 0 : i32
    %c0_i32_1 = arith.constant 0 : i32
    return %c0_i32, %c0_i32_0 : i32, i32
  }
  func.func @transform_7(%arg0: i32) -> (i32, i32) {
    %c0_i32 = arith.constant 0 : i32
    %c0_i32_0 = arith.constant 0 : i32
    return %arg0, %c0_i32 : i32, i32
  }
}

</mosaic_0001>

<llo_original>
// kernel: a3c_forward.1
$region0: #{a3c_forward.1}
  #allocation0 [shape = 'u32[]', space=smem, size = 0x4, offset = 0x4, fixed_abs, tag = 'smem constant byte address 0x4 - core index']
  #allocation1 [shape = 'u32[72,128]{1,0:T(1,128)}', space=vmem, size = 0x9000, scoped, tag = 'internal scratch']
  %s0 = inlined_call_operand.vmem [shape: f32[256,16], index: 0, kind: input, shape index: {}]
  %s1 = inlined_call_operand.vmem [shape: bf16[16,128], index: 1, kind: input, shape index: {}]
  %s2 = inlined_call_operand.vmem [shape: f32[1,128], index: 2, kind: input, shape index: {}]
  %s3 = inlined_call_operand.vmem [shape: bf16[128,256], index: 3, kind: input, shape index: {}]
  %s4 = inlined_call_operand.vmem [shape: f32[1,256], index: 4, kind: input, shape index: {}]
  %s5 = inlined_call_operand.vmem [shape: bf16[256,128], index: 5, kind: input, shape index: {}]
  %s6 = inlined_call_operand.vmem [shape: f32[1,128], index: 6, kind: input, shape index: {}]
  %s7 = inlined_call_operand.vmem [shape: f32[256,128], index: 7, kind: output, shape index: {}]
  %s8 = sld [smem:[#allocation0]]
  $region38: #{a3c_forward.1} parent=0
    _
  %s10 = ssub.s32 1, %s8
  %s11 = scalar_select 0, %s10, %s8
  // Predicated region
  $region2: #{a3c_forward.1} parent=0 // pred_check
    _
  $region3: #{a3c_forward.1} parent=0 // pred_check_branch
    %13 = sbr.rel (0) target = $region5
  $region4: #{a3c_forward.1} parent=0 // pred_region
    _
  $region5: #{a3c_forward.1} parent=0 // pred_fallthru
    _
  // Predicated region
  $region6: #{a3c_forward.1} parent=0 // pred_check
    _
  $region7: #{a3c_forward.1} parent=0 // pred_check_branch
    %15 = sbr.rel (0) target = $region9
  $region8: #{a3c_forward.1} parent=0 // pred_region
    _
  $region9: #{a3c_forward.1} parent=0 // pred_fallthru
    _
  // Predicated region
  $region10: #{a3c_forward.1} parent=0 // pred_check
    _
  $region11: #{a3c_forward.1} parent=0 // pred_check_branch
    %17 = sbr.rel (0) target = $region13
  $region12: #{a3c_forward.1} parent=0 // pred_region
    _
  $region13: #{a3c_forward.1} parent=0 // pred_fallthru
    _
  // Predicated region
  $region14: #{a3c_forward.1} parent=0 // pred_check
    _
  $region15: #{a3c_forward.1} parent=0 // pred_check_branch
    %19 = sbr.rel (0) target = $region17
  $region16: #{a3c_forward.1} parent=0 // pred_region
    _
  $region17: #{a3c_forward.1} parent=0 // pred_fallthru
    _
  // Predicated region
  $region18: #{a3c_forward.1} parent=0 // pred_check
    _
  $region19: #{a3c_forward.1} parent=0 // pred_check_branch
    %21 = sbr.rel (0) target = $region21
  $region20: #{a3c_forward.1} parent=0 // pred_region
    _
  $region21: #{a3c_forward.1} parent=0 // pred_fallthru
    _
  // Predicated region
  $region22: #{a3c_forward.1} parent=0 // pred_check
    _
  $region23: #{a3c_forward.1} parent=0 // pred_check_branch
    %23 = sbr.rel (0) target = $region25
  $region24: #{a3c_forward.1} parent=0 // pred_region
    _
  $region25: #{a3c_forward.1} parent=0 // pred_fallthru
    _
  // Predicated region
  $region26: #{a3c_forward.1} parent=0 // pred_check
    _
  $region27: #{a3c_forward.1} parent=0 // pred_check_branch
    %25 = sbr.rel (0) target = $region29
  $region28: #{a3c_forward.1} parent=0 // pred_region
    _
  $region29: #{a3c_forward.1} parent=0 // pred_fallthru
    _
  %v27 = vld [vmem:[%s0] sm:$0xff]
  %v28 = vld [vmem:[%s0 + $0x8] sm:$0xff]
  %v29 = vld [vmem:[%s0 + $0x10] sm:$0xff]
  %v30 = vld [vmem:[%s0 + $0x18] sm:$0xff]
  %v31 = vld [vmem:[%s0 + $0x20] sm:$0xff]
  %v32 = vld [vmem:[%s0 + $0x28] sm:$0xff]
  %v33 = vld [vmem:[%s0 + $0x30] sm:$0xff]
  %v34 = vld [vmem:[%s0 + $0x38] sm:$0xff]
  %v35 = vld [vmem:[%s0 + $0x40] sm:$0xff]
  %v36 = vld [vmem:[%s0 + $0x48] sm:$0xff]
  %v37 = vld [vmem:[%s0 + $0x50] sm:$0xff]
  %v38 = vld [vmem:[%s0 + $0x58] sm:$0xff]
  %v39 = vld [vmem:[%s0 + $0x60] sm:$0xff]
  %v40 = vld [vmem:[%s0 + $0x68] sm:$0xff]
  %v41 = vld [vmem:[%s0 + $0x70] sm:$0xff]
  %v42 = vld [vmem:[%s0 + $0x78] sm:$0xff]
  %v43 = vld [vmem:[%s0 + $0x80] sm:$0xff]
  %v44 = vld [vmem:[%s0 + $0x88] sm:$0xff]
  %v45 = vld [vmem:[%s0 + $0x90] sm:$0xff]
  %v46 = vld [vmem:[%s0 + $0x98] sm:$0xff]
  %v47 = vld [vmem:[%s0 + $0xa0] sm:$0xff]
  %v48 = vld [vmem:[%s0 + $0xa8] sm:$0xff]
  %v49 = vld [vmem:[%s0 + $0xb0] sm:$0xff]
  %v50 = vld [vmem:[%s0 + $0xb8] sm:$0xff]
  %v51 = vld [vmem:[%s0 + $0xc0] sm:$0xff]
  %v52 = vld [vmem:[%s0 + $0xc8] sm:$0xff]
  %v53 = vld [vmem:[%s0 + $0xd0] sm:$0xff]
  %v54 = vld [vmem:[%s0 + $0xd8] sm:$0xff]
  %v55 = vld [vmem:[%s0 + $0xe0] sm:$0xff]
  %v56 = vld [vmem:[%s0 + $0xe8] sm:$0xff]
  %v57 = vld [vmem:[%s0 + $0xf0] sm:$0xff]
  %v58 = vld [vmem:[%s0 + $0xf8] sm:$0xff]
  %v59 = vpack.c.bf16 %v28, %v27
  %v60 = vpack.c.bf16 %v30, %v29
  %v61 = vpack.c.bf16 %v32, %v31
  %v62 = vpack.c.bf16 %v34, %v33
  %v63 = vpack.c.bf16 %v36, %v35
  %v64 = vpack.c.bf16 %v38, %v37
  %v65 = vpack.c.bf16 %v40, %v39
  %v66 = vpack.c.bf16 %v42, %v41
  %v67 = vpack.c.bf16 %v44, %v43
  %v68 = vpack.c.bf16 %v46, %v45
  %v69 = vpack.c.bf16 %v48, %v47
  %v70 = vpack.c.bf16 %v50, %v49
  %v71 = vpack.c.bf16 %v52, %v51
  %v72 = vpack.c.bf16 %v54, %v53
  %v73 = vpack.c.bf16 %v56, %v55
  %v74 = vpack.c.bf16 %v58, %v57
  %v75 = vld [vmem:[%s1] sm:$0xf]
  %v76 = vld [vmem:[%s1 + $0x4] sm:$0xf]
  %v77 = vld [vmem:[%s2] sm:$0x1]
  %v79 = vperm.slane %v77, 0
  %v83 = vunpack.c.l.b16 %v75
  %v84 = vunpack.c.l.b16 %v76
  %v85 = vpack.c.b16 %v84, %v83
  %vm87 = vcmask 130048
  %v89 = vsel %vm87, %v59, 0
  %v92 = vsel %vm87, %v60, 0
  %v95 = vsel %vm87, %v61, 0
  %v98 = vsel %vm87, %v62, 0
  %v101 = vsel %vm87, %v63, 0
  %v104 = vsel %vm87, %v64, 0
  %v107 = vsel %vm87, %v65, 0
  %v110 = vsel %vm87, %v66, 0
  %v113 = vsel %vm87, %v67, 0
  %v116 = vsel %vm87, %v68, 0
  %v119 = vsel %vm87, %v69, 0
  %v122 = vsel %vm87, %v70, 0
  %v125 = vsel %vm87, %v71, 0
  %v128 = vsel %vm87, %v72, 0
  %v131 = vsel %vm87, %v73, 0
  %v134 = vsel %vm87, %v74, 0
  %136 = vmatpush.bf16.msra.mxu0 0
  %137 = vmatpush.bf16.msra.mxu0 0
  %138 = vmatpush.bf16.msra.mxu0 0
  %139 = vmatpush.bf16.msra.mxu0 0
  %140 = vmatpush.bf16.msra.mxu0 0
  %141 = vmatpush.bf16.msra.mxu0 0
  %142 = vmatpush.bf16.msra.mxu0 0
  %143 = vmatpush.bf16.msra.mxu0 %v85
  %144 = vmatmul.bf16.gmra.mxu0 %v89
  %v145 = vpop.f32.mrf.mxu0
  %v146 = vadd.f32 %v79, %v145
  %v147 = vpop.f32.mrf.mxu0
  %v148 = vadd.f32 %v79, %v147
  %149 = vmatmul.bf16.gmra.mxu0 %v92
  %v150 = vpop.f32.mrf.mxu0
  %v151 = vadd.f32 %v79, %v150
  %v152 = vpop.f32.mrf.mxu0
  %v153 = vadd.f32 %v79, %v152
  %154 = vmatmul.bf16.gmra.mxu0 %v95
  %v155 = vpop.f32.mrf.mxu0
  %v156 = vadd.f32 %v79, %v155
  %v157 = vpop.f32.mrf.mxu0
  %v158 = vadd.f32 %v79, %v157
  %159 = vmatmul.bf16.gmra.mxu0 %v98
  %v160 = vpop.f32.mrf.mxu0
  %v161 = vadd.f32 %v79, %v160
  %v162 = vpop.f32.mrf.mxu0
  %v163 = vadd.f32 %v79, %v162
  %164 = vmatmul.bf16.gmra.mxu0 %v101
  %v165 = vpop.f32.mrf.mxu0
  %v166 = vadd.f32 %v79, %v165
  %v167 = vpop.f32.mrf.mxu0
  %v168 = vadd.f32 %v79, %v167
  %169 = vmatmul.bf16.gmra.mxu0 %v104
  %v170 = vpop.f32.mrf.mxu0
  %v171 = vadd.f32 %v79, %v170
  %v172 = vpop.f32.mrf.mxu0
  %v173 = vadd.f32 %v79, %v172
  %174 = vmatmul.bf16.gmra.mxu0 %v107
  %v175 = vpop.f32.mrf.mxu0
  %v176 = vadd.f32 %v79, %v175
  %v177 = vpop.f32.mrf.mxu0
  %v178 = vadd.f32 %v79, %v177
  %179 = vmatmul.bf16.gmra.mxu0 %v110
  %v180 = vpop.f32.mrf.mxu0
  %v181 = vadd.f32 %v79, %v180
  %v182 = vpop.f32.mrf.mxu0
  %v183 = vadd.f32 %v79, %v182
  %184 = vmatmul.bf16.gmra.mxu0 %v113
  %v185 = vpop.f32.mrf.mxu0
  %v186 = vadd.f32 %v79, %v185
  %v187 = vpop.f32.mrf.mxu0
  %v188 = vadd.f32 %v79, %v187
  %189 = vmatmul.bf16.gmra.mxu0 %v116
  %v190 = vpop.f32.mrf.mxu0
  %v191 = vadd.f32 %v79, %v190
  %v192 = vpop.f32.mrf.mxu0
  %v193 = vadd.f32 %v79, %v192
  %194 = vmatmul.bf16.gmra.mxu0 %v119
  %v195 = vpop.f32.mrf.mxu0
  %v196 = vadd.f32 %v79, %v195
  %v197 = vpop.f32.mrf.mxu0
  %v198 = vadd.f32 %v79, %v197
  %199 = vmatmul.bf16.gmra.mxu0 %v122
  %v200 = vpop.f32.mrf.mxu0
  %v201 = vadd.f32 %v79, %v200
  %v202 = vpop.f32.mrf.mxu0
  %v203 = vadd.f32 %v79, %v202
  %204 = vmatmul.bf16.gmra.mxu0 %v125
  %v205 = vpop.f32.mrf.mxu0
  %v206 = vadd.f32 %v79, %v205
  %v207 = vpop.f32.mrf.mxu0
  %v208 = vadd.f32 %v79, %v207
  %209 = vmatmul.bf16.gmra.mxu0 %v128
  %v210 = vpop.f32.mrf.mxu0
  %v211 = vadd.f32 %v79, %v210
  %v212 = vpop.f32.mrf.mxu0
  %v213 = vadd.f32 %v79, %v212
  %214 = vmatmul.bf16.gmra.mxu0 %v131
  %v215 = vpop.f32.mrf.mxu0
  %v216 = vadd.f32 %v79, %v215
  %v217 = vpop.f32.mrf.mxu0
  %v218 = vadd.f32 %v79, %v217
  %219 = vmatmul.bf16.gmra.mxu0 %v134
  %v220 = vpop.f32.mrf.mxu0
  %v221 = vadd.f32 %v79, %v220
  %v222 = vpop.f32.mrf.mxu0
  %v223 = vadd.f32 %v79, %v222
  %224 = vdwg.mxu0
  %v225 = vmax.f32 %v146, 0.0
  %v226 = vmax.f32 %v148, 0.0
  %v227 = vmax.f32 %v151, 0.0
  %v228 = vmax.f32 %v153, 0.0
  %v229 = vmax.f32 %v156, 0.0
  %v230 = vmax.f32 %v158, 0.0
  %v231 = vmax.f32 %v161, 0.0
  %v232 = vmax.f32 %v163, 0.0
  %v233 = vmax.f32 %v166, 0.0
  %v234 = vmax.f32 %v168, 0.0
  %v235 = vmax.f32 %v171, 0.0
  %v236 = vmax.f32 %v173, 0.0
  %v237 = vmax.f32 %v176, 0.0
  %v238 = vmax.f32 %v178, 0.0
  %v239 = vmax.f32 %v181, 0.0
  %v240 = vmax.f32 %v183, 0.0
  %v241 = vmax.f32 %v186, 0.0
  %v242 = vmax.f32 %v188, 0.0
  %v243 = vmax.f32 %v191, 0.0
  %v244 = vmax.f32 %v193, 0.0
  %v245 = vmax.f32 %v196, 0.0
  %v246 = vmax.f32 %v198, 0.0
  %v247 = vmax.f32 %v201, 0.0
  %v248 = vmax.f32 %v203, 0.0
  %v249 = vmax.f32 %v206, 0.0
  %v250 = vmax.f32 %v208, 0.0
  %v251 = vmax.f32 %v211, 0.0
  %v252 = vmax.f32 %v213, 0.0
  %v253 = vmax.f32 %v216, 0.0
  %v254 = vmax.f32 %v218, 0.0
  %v255 = vmax.f32 %v221, 0.0
  %v256 = vmax.f32 %v223, 0.0
  %v257 = vpack.c.bf16 %v226, %v225
  %v258 = vpack.c.bf16 %v228, %v227
  %v259 = vpack.c.bf16 %v230, %v229
  %v260 = vpack.c.bf16 %v232, %v231
  %v261 = vpack.c.bf16 %v234, %v233
  %v262 = vpack.c.bf16 %v236, %v235
  %v263 = vpack.c.bf16 %v238, %v237
  %v264 = vpack.c.bf16 %v240, %v239
  %v265 = vpack.c.bf16 %v242, %v241
  %v266 = vpack.c.bf16 %v244, %v243
  %v267 = vpack.c.bf16 %v246, %v245
  %v268 = vpack.c.bf16 %v248, %v247
  %v269 = vpack.c.bf16 %v250, %v249
  %v270 = vpack.c.bf16 %v252, %v251
  %v271 = vpack.c.bf16 %v254, %v253
  %v272 = vpack.c.bf16 %v256, %v255
  %v273 = vld [vmem:[%s3] sm:$0xff]
  %v274 = vld [vmem:[%s3 + $0x8] sm:$0xff]
  %v275 = vld [vmem:[%s3 + $0x10] sm:$0xff]
  %v276 = vld [vmem:[%s3 + $0x18] sm:$0xff]
  %v277 = vld [vmem:[%s3 + $0x20] sm:$0xff]
  %v278 = vld [vmem:[%s3 + $0x28] sm:$0xff]
  %v279 = vld [vmem:[%s3 + $0x30] sm:$0xff]
  %v280 = vld [vmem:[%s3 + $0x38] sm:$0xff]
  %v281 = vld [vmem:[%s3 + $0x40] sm:$0xff]
  %v282 = vld [vmem:[%s3 + $0x48] sm:$0xff]
  %v283 = vld [vmem:[%s3 + $0x50] sm:$0xff]
  %v284 = vld [vmem:[%s3 + $0x58] sm:$0xff]
  %v285 = vld [vmem:[%s3 + $0x60] sm:$0xff]
  %v286 = vld [vmem:[%s3 + $0x68] sm:$0xff]
  %v287 = vld [vmem:[%s3 + $0x70] sm:$0xff]
  %v288 = vld [vmem:[%s3 + $0x78] sm:$0xff]
  %v289 = vld [vmem:[%s4] sm:$0x3]
  %v291 = vperm.slane %v289, 0
  %v292 = vperm.slane %v289, 1
  %v311 = vunpack.c.l.b16 %v273
  %v312 = vunpack.c.h.b16 %v273
  %v313 = vunpack.c.l.b16 %v274
  %v314 = vunpack.c.h.b16 %v274
  %v315 = vunpack.c.l.b16 %v275
  %v316 = vunpack.c.h.b16 %v275
  %v317 = vunpack.c.l.b16 %v276
  %v318 = vunpack.c.h.b16 %v276
  %v319 = vunpack.c.l.b16 %v277
  %v320 = vunpack.c.h.b16 %v277
  %v321 = vunpack.c.l.b16 %v278
  %v322 = vunpack.c.h.b16 %v278
  %v323 = vunpack.c.l.b16 %v279
  %v324 = vunpack.c.h.b16 %v279
  %v325 = vunpack.c.l.b16 %v280
  %v326 = vunpack.c.h.b16 %v280
  %v327 = vunpack.c.l.b16 %v281
  %v328 = vunpack.c.h.b16 %v281
  %v329 = vunpack.c.l.b16 %v282
  %v330 = vunpack.c.h.b16 %v282
  %v331 = vunpack.c.l.b16 %v283
  %v332 = vunpack.c.h.b16 %v283
  %v333 = vunpack.c.l.b16 %v284
  %v334 = vunpack.c.h.b16 %v284
  %v335 = vunpack.c.l.b16 %v285
  %v336 = vunpack.c.h.b16 %v285
  %v337 = vunpack.c.l.b16 %v286
  %v338 = vunpack.c.h.b16 %v286
  %v339 = vunpack.c.l.b16 %v287
  %v340 = vunpack.c.h.b16 %v287
  %v341 = vunpack.c.l.b16 %v288
  %v342 = vunpack.c.h.b16 %v288
  %v343 = vpack.c.b16 %v313, %v311
  %v344 = vpack.c.b16 %v314, %v312
  %v345 = vpack.c.b16 %v317, %v315
  %v346 = vpack.c.b16 %v318, %v316
  %v347 = vpack.c.b16 %v321, %v319
  %v348 = vpack.c.b16 %v322, %v320
  %v349 = vpack.c.b16 %v325, %v323
  %v350 = vpack.c.b16 %v326, %v324
  %v351 = vpack.c.b16 %v329, %v327
  %v352 = vpack.c.b16 %v330, %v328
  %v353 = vpack.c.b16 %v333, %v331
  %v354 = vpack.c.b16 %v334, %v332
  %v355 = vpack.c.b16 %v337, %v335
  %v356 = vpack.c.b16 %v338, %v336
  %v357 = vpack.c.b16 %v341, %v339
  %v358 = vpack.c.b16 %v342, %v340
  %375 = vmatpush.bf16.msra.mxu0 %v357
  %376 = vmatpush.bf16.msra.mxu0 %v355
  %377 = vmatpush.bf16.msra.mxu0 %v353
  %378 = vmatpush.bf16.msra.mxu0 %v351
  %379 = vmatpush.bf16.msra.mxu0 %v349
  %380 = vmatpush.bf16.msra.mxu0 %v347
  %381 = vmatpush.bf16.msra.mxu0 %v345
  %382 = vmatpush.bf16.msra.mxu0 %v343
  %383 = vmatmul.bf16.gmra.mxu0 %v257
  %v384 = vpop.f32.mrf.mxu0
  %v385 = vadd.f32 %v291, %v384
  %v386 = vpop.f32.mrf.mxu0
  %v387 = vadd.f32 %v291, %v386
  %388 = vmatmul.bf16.gmra.mxu0 %v258
  %v389 = vpop.f32.mrf.mxu0
  %v390 = vadd.f32 %v291, %v389
  %v391 = vpop.f32.mrf.mxu0
  %v392 = vadd.f32 %v291, %v391
  %393 = vmatmul.bf16.gmra.mxu0 %v259
  %v394 = vpop.f32.mrf.mxu0
  %v395 = vadd.f32 %v291, %v394
  %v396 = vpop.f32.mrf.mxu0
  %v397 = vadd.f32 %v291, %v396
  %398 = vmatmul.bf16.gmra.mxu0 %v260
  %v399 = vpop.f32.mrf.mxu0
  %v400 = vadd.f32 %v291, %v399
  %v401 = vpop.f32.mrf.mxu0
  %v402 = vadd.f32 %v291, %v401
  %403 = vmatmul.bf16.gmra.mxu0 %v261
  %v404 = vpop.f32.mrf.mxu0
  %v405 = vadd.f32 %v291, %v404
  %v406 = vpop.f32.mrf.mxu0
  %v407 = vadd.f32 %v291, %v406
  %408 = vmatmul.bf16.gmra.mxu0 %v262
  %v409 = vpop.f32.mrf.mxu0
  %v410 = vadd.f32 %v291, %v409
  %v411 = vpop.f32.mrf.mxu0
  %v412 = vadd.f32 %v291, %v411
  %413 = vmatmul.bf16.gmra.mxu0 %v263
  %v414 = vpop.f32.mrf.mxu0
  %v415 = vadd.f32 %v291, %v414
  %v416 = vpop.f32.mrf.mxu0
  %v417 = vadd.f32 %v291, %v416
  %418 = vmatmul.bf16.gmra.mxu0 %v264
  %v419 = vpop.f32.mrf.mxu0
  %v420 = vadd.f32 %v291, %v419
  %v421 = vpop.f32.mrf.mxu0
  %v422 = vadd.f32 %v291, %v421
  %423 = vmatmul.bf16.gmra.mxu0 %v265
  %v424 = vpop.f32.mrf.mxu0
  %v425 = vadd.f32 %v291, %v424
  %v426 = vpop.f32.mrf.mxu0
  %v427 = vadd.f32 %v291, %v426
  %428 = vmatmul.bf16.gmra.mxu0 %v266
  %v429 = vpop.f32.mrf.mxu0
  %v430 = vadd.f32 %v291, %v429
  %v431 = vpop.f32.mrf.mxu0
  %v432 = vadd.f32 %v291, %v431
  %433 = vmatmul.bf16.gmra.mxu0 %v267
  %v434 = vpop.f32.mrf.mxu0
  %v435 = vadd.f32 %v291, %v434
  %v436 = vpop.f32.mrf.mxu0
  %v437 = vadd.f32 %v291, %v436
  %438 = vmatmul.bf16.gmra.mxu0 %v268
  %v439 = vpop.f32.mrf.mxu0
  %v440 = vadd.f32 %v291, %v439
  %v441 = vpop.f32.mrf.mxu0
  %v442 = vadd.f32 %v291, %v441
  %443 = vmatmul.bf16.gmra.mxu0 %v269
  %v444 = vpop.f32.mrf.mxu0
  %v445 = vadd.f32 %v291, %v444
  %v446 = vpop.f32.mrf.mxu0
  %v447 = vadd.f32 %v291, %v446
  %448 = vmatmul.bf16.gmra.mxu0 %v270
  %v449 = vpop.f32.mrf.mxu0
  %v450 = vadd.f32 %v291, %v449
  %v451 = vpop.f32.mrf.mxu0
  %v452 = vadd.f32 %v291, %v451
  %453 = vmatmul.bf16.gmra.mxu0 %v271
  %v454 = vpop.f32.mrf.mxu0
  %v455 = vadd.f32 %v291, %v454
  %v456 = vpop.f32.mrf.mxu0
  %v457 = vadd.f32 %v291, %v456
  %458 = vmatmul.bf16.gmra.mxu0 %v272
  %v459 = vpop.f32.mrf.mxu0
  %v460 = vadd.f32 %v291, %v459
  %v461 = vpop.f32.mrf.mxu0
  %v462 = vadd.f32 %v291, %v461
  %463 = vdwg.mxu0
  %464 = vmatpush.bf16.msra.mxu0 %v358
  %465 = vmatpush.bf16.msra.mxu0 %v356
  %466 = vmatpush.bf16.msra.mxu0 %v354
  %467 = vmatpush.bf16.msra.mxu0 %v352
  %468 = vmatpush.bf16.msra.mxu0 %v350
  %469 = vmatpush.bf16.msra.mxu0 %v348
  %470 = vmatpush.bf16.msra.mxu0 %v346
  %471 = vmatpush.bf16.msra.mxu0 %v344
  %472 = vmatmul.bf16.gmra.mxu0 %v257
  %v473 = vpop.f32.mrf.mxu0
  %v474 = vadd.f32 %v292, %v473
  %v475 = vpop.f32.mrf.mxu0
  %v476 = vadd.f32 %v292, %v475
  %477 = vmatmul.bf16.gmra.mxu0 %v258
  %v478 = vpop.f32.mrf.mxu0
  %v479 = vadd.f32 %v292, %v478
  %v480 = vpop.f32.mrf.mxu0
  %v481 = vadd.f32 %v292, %v480
  %482 = vmatmul.bf16.gmra.mxu0 %v259
  %v483 = vpop.f32.mrf.mxu0
  %v484 = vadd.f32 %v292, %v483
  %v485 = vpop.f32.mrf.mxu0
  %v486 = vadd.f32 %v292, %v485
  %487 = vmatmul.bf16.gmra.mxu0 %v260
  %v488 = vpop.f32.mrf.mxu0
  %v489 = vadd.f32 %v292, %v488
  %v490 = vpop.f32.mrf.mxu0
  %v491 = vadd.f32 %v292, %v490
  %492 = vmatmul.bf16.gmra.mxu0 %v261
  %v493 = vpop.f32.mrf.mxu0
  %v494 = vadd.f32 %v292, %v493
  %v495 = vpop.f32.mrf.mxu0
  %v496 = vadd.f32 %v292, %v495
  %497 = vmatmul.bf16.gmra.mxu0 %v262
  %v498 = vpop.f32.mrf.mxu0
  %v499 = vadd.f32 %v292, %v498
  %v500 = vpop.f32.mrf.mxu0
  %v501 = vadd.f32 %v292, %v500
  %502 = vmatmul.bf16.gmra.mxu0 %v263
  %v503 = vpop.f32.mrf.mxu0
  %v504 = vadd.f32 %v292, %v503
  %v505 = vpop.f32.mrf.mxu0
  %v506 = vadd.f32 %v292, %v505
  %507 = vmatmul.bf16.gmra.mxu0 %v264
  %v508 = vpop.f32.mrf.mxu0
  %v509 = vadd.f32 %v292, %v508
  %v510 = vpop.f32.mrf.mxu0
  %v511 = vadd.f32 %v292, %v510
  %512 = vmatmul.bf16.gmra.mxu0 %v265
  %v513 = vpop.f32.mrf.mxu0
  %v514 = vadd.f32 %v292, %v513
  %v515 = vpop.f32.mrf.mxu0
  %v516 = vadd.f32 %v292, %v515
  %517 = vmatmul.bf16.gmra.mxu0 %v266
  %v518 = vpop.f32.mrf.mxu0
  %v519 = vadd.f32 %v292, %v518
  %v520 = vpop.f32.mrf.mxu0
  %v521 = vadd.f32 %v292, %v520
  %522 = vmatmul.bf16.gmra.mxu0 %v267
  %v523 = vpop.f32.mrf.mxu0
  %v524 = vadd.f32 %v292, %v523
  %v525 = vpop.f32.mrf.mxu0
  %v526 = vadd.f32 %v292, %v525
  %527 = vmatmul.bf16.gmra.mxu0 %v268
  %v528 = vpop.f32.mrf.mxu0
  %v529 = vadd.f32 %v292, %v528
  %v530 = vpop.f32.mrf.mxu0
  %v531 = vadd.f32 %v292, %v530
  %532 = vmatmul.bf16.gmra.mxu0 %v269
  %v533 = vpop.f32.mrf.mxu0
  %v534 = vadd.f32 %v292, %v533
  %v535 = vpop.f32.mrf.mxu0
  %v536 = vadd.f32 %v292, %v535
  %537 = vmatmul.bf16.gmra.mxu0 %v270
  %v538 = vpop.f32.mrf.mxu0
  %v539 = vadd.f32 %v292, %v538
  %v540 = vpop.f32.mrf.mxu0
  %v541 = vadd.f32 %v292, %v540
  %542 = vmatmul.bf16.gmra.mxu0 %v271
  %v543 = vpop.f32.mrf.mxu0
  %v544 = vadd.f32 %v292, %v543
  %v545 = vpop.f32.mrf.mxu0
  %v546 = vadd.f32 %v292, %v545
  %547 = vmatmul.bf16.gmra.mxu0 %v272
  %v548 = vpop.f32.mrf.mxu0
  %v549 = vadd.f32 %v292, %v548
  %v550 = vpop.f32.mrf.mxu0
  %v551 = vadd.f32 %v292, %v550
  %552 = vdwg.mxu0
  %v553 = vmax.f32 %v385, 0.0
  %v554 = vmax.f32 %v474, 0.0
  %v555 = vmax.f32 %v387, 0.0
  %v556 = vmax.f32 %v476, 0.0
  %v557 = vmax.f32 %v390, 0.0
  %v558 = vmax.f32 %v479, 0.0
  %v559 = vmax.f32 %v392, 0.0
  %v560 = vmax.f32 %v481, 0.0
  %v561 = vmax.f32 %v395, 0.0
  %v562 = vmax.f32 %v484, 0.0
  %v563 = vmax.f32 %v397, 0.0
  %v564 = vmax.f32 %v486, 0.0
  %v565 = vmax.f32 %v400, 0.0
  %v566 = vmax.f32 %v489, 0.0
  %v567 = vmax.f32 %v402, 0.0
  %v568 = vmax.f32 %v491, 0.0
  %v569 = vmax.f32 %v405, 0.0
  %v570 = vmax.f32 %v494, 0.0
  %v571 = vmax.f32 %v407, 0.0
  %v572 = vmax.f32 %v496, 0.0
  %v573 = vmax.f32 %v410, 0.0
  %v574 = vmax.f32 %v499, 0.0
  %v575 = vmax.f32 %v412, 0.0
  %v576 = vmax.f32 %v501, 0.0
  %v577 = vmax.f32 %v415, 0.0
  %v578 = vmax.f32 %v504, 0.0
  %v579 = vmax.f32 %v417, 0.0
  %v580 = vmax.f32 %v506, 0.0
  %v581 = vmax.f32 %v420, 0.0
  %v582 = vmax.f32 %v509, 0.0
  %v583 = vmax.f32 %v422, 0.0
  %v584 = vmax.f32 %v511, 0.0
  %v585 = vmax.f32 %v425, 0.0
  %v586 = vmax.f32 %v514, 0.0
  %v587 = vmax.f32 %v427, 0.0
  %v588 = vmax.f32 %v516, 0.0
  %v589 = vmax.f32 %v430, 0.0
  %v590 = vmax.f32 %v519, 0.0
  %v591 = vmax.f32 %v432, 0.0
  %v592 = vmax.f32 %v521, 0.0
  %v593 = vmax.f32 %v435, 0.0
  %v594 = vmax.f32 %v524, 0.0
  %v595 = vmax.f32 %v437, 0.0
  %v596 = vmax.f32 %v526, 0.0
  %v597 = vmax.f32 %v440, 0.0
  %v598 = vmax.f32 %v529, 0.0
  %v599 = vmax.f32 %v442, 0.0
  %v600 = vmax.f32 %v531, 0.0
  %v601 = vmax.f32 %v445, 0.0
  %v602 = vmax.f32 %v534, 0.0
  %v603 = vmax.f32 %v447, 0.0
  %v604 = vmax.f32 %v536, 0.0
  %v605 = vmax.f32 %v450, 0.0
  %v606 = vmax.f32 %v539, 0.0
  %v607 = vmax.f32 %v452, 0.0
  %v608 = vmax.f32 %v541, 0.0
  %v609 = vmax.f32 %v455, 0.0
  %v610 = vmax.f32 %v544, 0.0
  %v611 = vmax.f32 %v457, 0.0
  %v612 = vmax.f32 %v546, 0.0
  %v613 = vmax.f32 %v460, 0.0
  %v614 = vmax.f32 %v549, 0.0
  %v615 = vmax.f32 %v462, 0.0
  %v616 = vmax.f32 %v551, 0.0
  %v617 = vpack.c.bf16 %v555, %v553
  %v618 = vpack.c.bf16 %v556, %v554
  %v619 = vpack.c.bf16 %v559, %v557
  %v620 = vpack.c.bf16 %v560, %v558
  %v621 = vpack.c.bf16 %v563, %v561
  %v622 = vpack.c.bf16 %v564, %v562
  %v623 = vpack.c.bf16 %v567, %v565
  %v624 = vpack.c.bf16 %v568, %v566
  %v625 = vpack.c.bf16 %v571, %v569
  %v626 = vpack.c.bf16 %v572, %v570
  %v627 = vpack.c.bf16 %v575, %v573
  %v628 = vpack.c.bf16 %v576, %v574
  %v629 = vpack.c.bf16 %v579, %v577
  %v630 = vpack.c.bf16 %v580, %v578
  %v631 = vpack.c.bf16 %v583, %v581
  %v632 = vpack.c.bf16 %v584, %v582
  %v633 = vpack.c.bf16 %v587, %v585
  %v634 = vpack.c.bf16 %v588, %v586
  %v635 = vpack.c.bf16 %v591, %v589
  %v636 = vpack.c.bf16 %v592, %v590
  %v637 = vpack.c.bf16 %v595, %v593
  %v638 = vpack.c.bf16 %v596, %v594
  %v639 = vpack.c.bf16 %v599, %v597
  %v640 = vpack.c.bf16 %v600, %v598
  %v641 = vpack.c.bf16 %v603, %v601
  %v642 = vpack.c.bf16 %v604, %v602
  %v643 = vpack.c.bf16 %v607, %v605
  %v644 = vpack.c.bf16 %v608, %v606
  %v645 = vpack.c.bf16 %v611, %v609
  %v646 = vpack.c.bf16 %v612, %v610
  %v647 = vpack.c.bf16 %v615, %v613
  %v648 = vpack.c.bf16 %v616, %v614
  %v649 = vld [vmem:[%s5] sm:$0xf]
  %v650 = vld [vmem:[%s5 + $0x4] sm:$0xf]
  %v651 = vld [vmem:[%s5 + $0x8] sm:$0xf]
  %v652 = vld [vmem:[%s5 + $0xc] sm:$0xf]
  %v653 = vld [vmem:[%s5 + $0x10] sm:$0xf]
  %v654 = vld [vmem:[%s5 + $0x14] sm:$0xf]
  %v655 = vld [vmem:[%s5 + $0x18] sm:$0xf]
  %v656 = vld [vmem:[%s5 + $0x1c] sm:$0xf]
  %v657 = vld [vmem:[%s5 + $0x20] sm:$0xf]
  %v658 = vld [vmem:[%s5 + $0x24] sm:$0xf]
  %v659 = vld [vmem:[%s5 + $0x28] sm:$0xf]
  %v660 = vld [vmem:[%s5 + $0x2c] sm:$0xf]
  %v661 = vld [vmem:[%s5 + $0x30] sm:$0xf]
  %v662 = vld [vmem:[%s5 + $0x34] sm:$0xf]
  %v663 = vld [vmem:[%s5 + $0x38] sm:$0xf]
  %v664 = vld [vmem:[%s5 + $0x3c] sm:$0xf]
  %v665 = vld [vmem:[%s5 + $0x40] sm:$0xf]
  %v666 = vld [vmem:[%s5 + $0x44] sm:$0xf]
  %v667 = vld [vmem:[%s5 + $0x48] sm:$0xf]
  %v668 = vld [vmem:[%s5 + $0x4c] sm:$0xf]
  %v669 = vld [vmem:[%s5 + $0x50] sm:$0xf]
  %v670 = vld [vmem:[%s5 + $0x54] sm:$0xf]
  %v671 = vld [vmem:[%s5 + $0x58] sm:$0xf]
  %v672 = vld [vmem:[%s5 + $0x5c] sm:$0xf]
  %v673 = vld [vmem:[%s5 + $0x60] sm:$0xf]
  %v674 = vld [vmem:[%s5 + $0x64] sm:$0xf]
  %v675 = vld [vmem:[%s5 + $0x68] sm:$0xf]
  %v676 = vld [vmem:[%s5 + $0x6c] sm:$0xf]
  %v677 = vld [vmem:[%s5 + $0x70] sm:$0xf]
  %v678 = vld [vmem:[%s5 + $0x74] sm:$0xf]
  %v679 = vld [vmem:[%s5 + $0x78] sm:$0xf]
  %v680 = vld [vmem:[%s5 + $0x7c] sm:$0xf]
  %v681 = vld [vmem:[%s6] sm:$0x1]
  %v683 = vperm.slane %v681, 0
  %v717 = vunpack.c.l.b16 %v649
  %v718 = vunpack.c.l.b16 %v650
  %v719 = vunpack.c.l.b16 %v651
  %v720 = vunpack.c.l.b16 %v652
  %v721 = vunpack.c.l.b16 %v653
  %v722 = vunpack.c.l.b16 %v654
  %v723 = vunpack.c.l.b16 %v655
  %v724 = vunpack.c.l.b16 %v656
  %v725 = vunpack.c.l.b16 %v657
  %v726 = vunpack.c.l.b16 %v658
  %v727 = vunpack.c.l.b16 %v659
  %v728 = vunpack.c.l.b16 %v660
  %v729 = vunpack.c.l.b16 %v661
  %v730 = vunpack.c.l.b16 %v662
  %v731 = vunpack.c.l.b16 %v663
  %v732 = vunpack.c.l.b16 %v664
  %v733 = vunpack.c.l.b16 %v665
  %v734 = vunpack.c.l.b16 %v666
  %v735 = vunpack.c.l.b16 %v667
  %v736 = vunpack.c.l.b16 %v668
  %v737 = vunpack.c.l.b16 %v669
  %v738 = vunpack.c.l.b16 %v670
  %v739 = vunpack.c.l.b16 %v671
  %v740 = vunpack.c.l.b16 %v672
  %v741 = vunpack.c.l.b16 %v673
  %v742 = vunpack.c.l.b16 %v674
  %v743 = vunpack.c.l.b16 %v675
  %v744 = vunpack.c.l.b16 %v676
  %v745 = vunpack.c.l.b16 %v677
  %v746 = vunpack.c.l.b16 %v678
  %v747 = vunpack.c.l.b16 %v679
  %v748 = vunpack.c.l.b16 %v680
  %v749 = vpack.c.b16 %v718, %v717
  %v750 = vpack.c.b16 %v720, %v719
  %v751 = vpack.c.b16 %v722, %v721
  %v752 = vpack.c.b16 %v724, %v723
  %v753 = vpack.c.b16 %v726, %v725
  %v754 = vpack.c.b16 %v728, %v727
  %v755 = vpack.c.b16 %v730, %v729
  %v756 = vpack.c.b16 %v732, %v731
  %v757 = vpack.c.b16 %v734, %v733
  %v758 = vpack.c.b16 %v736, %v735
  %v759 = vpack.c.b16 %v738, %v737
  %v760 = vpack.c.b16 %v740, %v739
  %v761 = vpack.c.b16 %v742, %v741
  %v762 = vpack.c.b16 %v744, %v743
  %v763 = vpack.c.b16 %v746, %v745
  %v764 = vpack.c.b16 %v748, %v747
  %781 = vmatpush.bf16.msra.mxu0 %v756
  %782 = vmatpush.bf16.msra.mxu0 %v755
  %783 = vmatpush.bf16.msra.mxu0 %v754
  %784 = vmatpush.bf16.msra.mxu0 %v753
  %785 = vmatpush.bf16.msra.mxu0 %v752
  %786 = vmatpush.bf16.msra.mxu0 %v751
  %787 = vmatpush.bf16.msra.mxu0 %v750
  %788 = vmatpush.bf16.msra.mxu0 %v749
  %789 = vmatmul.bf16.gmra.mxu0 %v617
  %v790 = vpop.f32.mrf.mxu0
  %v791 = vadd.f32 %v683, %v790
  %v792 = vpop.f32.mrf.mxu0
  %v793 = vadd.f32 %v683, %v792
  %794 = vmatmul.bf16.gmra.mxu0 %v619
  %v795 = vpop.f32.mrf.mxu0
  %v796 = vadd.f32 %v683, %v795
  %v797 = vpop.f32.mrf.mxu0
  %v798 = vadd.f32 %v683, %v797
  %799 = vmatmul.bf16.gmra.mxu0 %v621
  %v800 = vpop.f32.mrf.mxu0
  %v801 = vadd.f32 %v683, %v800
  %v802 = vpop.f32.mrf.mxu0
  %v803 = vadd.f32 %v683, %v802
  %804 = vmatmul.bf16.gmra.mxu0 %v623
  %v805 = vpop.f32.mrf.mxu0
  %v806 = vadd.f32 %v683, %v805
  %v807 = vpop.f32.mrf.mxu0
  %v808 = vadd.f32 %v683, %v807
  %809 = vmatmul.bf16.gmra.mxu0 %v625
  %v810 = vpop.f32.mrf.mxu0
  %v811 = vadd.f32 %v683, %v810
  %v812 = vpop.f32.mrf.mxu0
  %v813 = vadd.f32 %v683, %v812
  %814 = vmatmul.bf16.gmra.mxu0 %v627
  %v815 = vpop.f32.mrf.mxu0
  %v816 = vadd.f32 %v683, %v815
  %v817 = vpop.f32.mrf.mxu0
  %v818 = vadd.f32 %v683, %v817
  %819 = vmatmul.bf16.gmra.mxu0 %v629
  %v820 = vpop.f32.mrf.mxu0
  %v821 = vadd.f32 %v683, %v820
  %v822 = vpop.f32.mrf.mxu0
  %v823 = vadd.f32 %v683, %v822
  %824 = vmatmul.bf16.gmra.mxu0 %v631
  %v825 = vpop.f32.mrf.mxu0
  %v826 = vadd.f32 %v683, %v825
  %v827 = vpop.f32.mrf.mxu0
  %v828 = vadd.f32 %v683, %v827
  %829 = vmatmul.bf16.gmra.mxu0 %v633
  %v830 = vpop.f32.mrf.mxu0
  %v831 = vadd.f32 %v683, %v830
  %v832 = vpop.f32.mrf.mxu0
  %v833 = vadd.f32 %v683, %v832
  %834 = vmatmul.bf16.gmra.mxu0 %v635
  %v835 = vpop.f32.mrf.mxu0
  %v836 = vadd.f32 %v683, %v835
  %v837 = vpop.f32.mrf.mxu0
  %v838 = vadd.f32 %v683, %v837
  %839 = vmatmul.bf16.gmra.mxu0 %v637
  %v840 = vpop.f32.mrf.mxu0
  %v841 = vadd.f32 %v683, %v840
  %v842 = vpop.f32.mrf.mxu0
  %v843 = vadd.f32 %v683, %v842
  %844 = vmatmul.bf16.gmra.mxu0 %v639
  %v845 = vpop.f32.mrf.mxu0
  %v846 = vadd.f32 %v683, %v845
  %v847 = vpop.f32.mrf.mxu0
  %v848 = vadd.f32 %v683, %v847
  %849 = vmatmul.bf16.gmra.mxu0 %v641
  %v850 = vpop.f32.mrf.mxu0
  %v851 = vadd.f32 %v683, %v850
  %v852 = vpop.f32.mrf.mxu0
  %v853 = vadd.f32 %v683, %v852
  %854 = vmatmul.bf16.gmra.mxu0 %v643
  %v855 = vpop.f32.mrf.mxu0
  %v856 = vadd.f32 %v683, %v855
  %v857 = vpop.f32.mrf.mxu0
  %v858 = vadd.f32 %v683, %v857
  %859 = vmatmul.bf16.gmra.mxu0 %v645
  %v860 = vpop.f32.mrf.mxu0
  %v861 = vadd.f32 %v683, %v860
  %v862 = vpop.f32.mrf.mxu0
  %v863 = vadd.f32 %v683, %v862
  %864 = vmatmul.bf16.gmra.mxu0 %v647
  %v865 = vpop.f32.mrf.mxu0
  %v866 = vadd.f32 %v683, %v865
  %v867 = vpop.f32.mrf.mxu0
  %v868 = vadd.f32 %v683, %v867
  %869 = vdwg.mxu0
  %870 = vmatpush.bf16.msra.mxu0 %v764
  %871 = vmatpush.bf16.msra.mxu0 %v763
  %872 = vmatpush.bf16.msra.mxu0 %v762
  %873 = vmatpush.bf16.msra.mxu0 %v761
  %874 = vmatpush.bf16.msra.mxu0 %v760
  %875 = vmatpush.bf16.msra.mxu0 %v759
  %876 = vmatpush.bf16.msra.mxu0 %v758
  %877 = vmatpush.bf16.msra.mxu0 %v757
  %878 = vmatmul.bf16.gmra.mxu0 %v618
  %v879 = vpop.f32.mrf.mxu0
  %v880 = vadd.f32 %v791, %v879
  %v881 = vpop.f32.mrf.mxu0
  %v882 = vadd.f32 %v793, %v881
  %883 = vmatmul.bf16.gmra.mxu0 %v620
  %v884 = vpop.f32.mrf.mxu0
  %v885 = vadd.f32 %v796, %v884
  %v886 = vpop.f32.mrf.mxu0
  %v887 = vadd.f32 %v798, %v886
  %888 = vmatmul.bf16.gmra.mxu0 %v622
  %v889 = vpop.f32.mrf.mxu0
  %v890 = vadd.f32 %v801, %v889
  %v891 = vpop.f32.mrf.mxu0
  %v892 = vadd.f32 %v803, %v891
  %893 = vmatmul.bf16.gmra.mxu0 %v624
  %v894 = vpop.f32.mrf.mxu0
  %v895 = vadd.f32 %v806, %v894
  %v896 = vpop.f32.mrf.mxu0
  %v897 = vadd.f32 %v808, %v896
  %898 = vmatmul.bf16.gmra.mxu0 %v626
  %v899 = vpop.f32.mrf.mxu0
  %v900 = vadd.f32 %v811, %v899
  %v901 = vpop.f32.mrf.mxu0
  %v902 = vadd.f32 %v813, %v901
  %903 = vmatmul.bf16.gmra.mxu0 %v628
  %v904 = vpop.f32.mrf.mxu0
  %v905 = vadd.f32 %v816, %v904
  %v906 = vpop.f32.mrf.mxu0
  %v907 = vadd.f32 %v818, %v906
  %908 = vmatmul.bf16.gmra.mxu0 %v630
  %v909 = vpop.f32.mrf.mxu0
  %v910 = vadd.f32 %v821, %v909
  %v911 = vpop.f32.mrf.mxu0
  %v912 = vadd.f32 %v823, %v911
  %913 = vmatmul.bf16.gmra.mxu0 %v632
  %v914 = vpop.f32.mrf.mxu0
  %v915 = vadd.f32 %v826, %v914
  %v916 = vpop.f32.mrf.mxu0
  %v917 = vadd.f32 %v828, %v916
  %918 = vmatmul.bf16.gmra.mxu0 %v634
  %v919 = vpop.f32.mrf.mxu0
  %v920 = vadd.f32 %v831, %v919
  %v921 = vpop.f32.mrf.mxu0
  %v922 = vadd.f32 %v833, %v921
  %923 = vmatmul.bf16.gmra.mxu0 %v636
  %v924 = vpop.f32.mrf.mxu0
  %v925 = vadd.f32 %v836, %v924
  %v926 = vpop.f32.mrf.mxu0
  %v927 = vadd.f32 %v838, %v926
  %928 = vmatmul.bf16.gmra.mxu0 %v638
  %v929 = vpop.f32.mrf.mxu0
  %v930 = vadd.f32 %v841, %v929
  %v931 = vpop.f32.mrf.mxu0
  %v932 = vadd.f32 %v843, %v931
  %933 = vmatmul.bf16.gmra.mxu0 %v640
  %v934 = vpop.f32.mrf.mxu0
  %v935 = vadd.f32 %v846, %v934
  %v936 = vpop.f32.mrf.mxu0
  %v937 = vadd.f32 %v848, %v936
  %938 = vmatmul.bf16.gmra.mxu0 %v642
  %v939 = vpop.f32.mrf.mxu0
  %v940 = vadd.f32 %v851, %v939
  %v941 = vpop.f32.mrf.mxu0
  %v942 = vadd.f32 %v853, %v941
  %943 = vmatmul.bf16.gmra.mxu0 %v644
  %v944 = vpop.f32.mrf.mxu0
  %v945 = vadd.f32 %v856, %v944
  %v946 = vpop.f32.mrf.mxu0
  %v947 = vadd.f32 %v858, %v946
  %948 = vmatmul.bf16.gmra.mxu0 %v646
  %v949 = vpop.f32.mrf.mxu0
  %v950 = vadd.f32 %v861, %v949
  %v951 = vpop.f32.mrf.mxu0
  %v952 = vadd.f32 %v863, %v951
  %953 = vmatmul.bf16.gmra.mxu0 %v648
  %v954 = vpop.f32.mrf.mxu0
  %v955 = vadd.f32 %v866, %v954
  %v956 = vpop.f32.mrf.mxu0
  %v957 = vadd.f32 %v868, %v956
  %958 = vdwg.mxu0
  %v959 = vlaneseq
  %v960 = vand.u32 %v959, 127
  %vm961 = vcmp.lt.s32.totalorder %v960, 8
  %v962 = vsel %vm961, %v880, -1e+30
  %v963 = vsel %vm961, %v882, -1e+30
  %v964 = vsel %vm961, %v885, -1e+30
  %v965 = vsel %vm961, %v887, -1e+30
  %v966 = vsel %vm961, %v890, -1e+30
  %v967 = vsel %vm961, %v892, -1e+30
  %v968 = vsel %vm961, %v895, -1e+30
  %v969 = vsel %vm961, %v897, -1e+30
  %v970 = vsel %vm961, %v900, -1e+30
  %v971 = vsel %vm961, %v902, -1e+30
  %v972 = vsel %vm961, %v905, -1e+30
  %v973 = vsel %vm961, %v907, -1e+30
  %v974 = vsel %vm961, %v910, -1e+30
  %v975 = vsel %vm961, %v912, -1e+30
  %v976 = vsel %vm961, %v915, -1e+30
  %v977 = vsel %vm961, %v917, -1e+30
  %v978 = vsel %vm961, %v920, -1e+30
  %v979 = vsel %vm961, %v922, -1e+30
  %v980 = vsel %vm961, %v925, -1e+30
  %v981 = vsel %vm961, %v927, -1e+30
  %v982 = vsel %vm961, %v930, -1e+30
  %v983 = vsel %vm961, %v932, -1e+30
  %v984 = vsel %vm961, %v935, -1e+30
  %v985 = vsel %vm961, %v937, -1e+30
  %v986 = vsel %vm961, %v940, -1e+30
  %v987 = vsel %vm961, %v942, -1e+30
  %v988 = vsel %vm961, %v945, -1e+30
  %v989 = vsel %vm961, %v947, -1e+30
  %v990 = vsel %vm961, %v950, -1e+30
  %v991 = vsel %vm961, %v952, -1e+30
  %v992 = vsel %vm961, %v955, -1e+30
  %v993 = vsel %vm961, %v957, -1e+30
  %994 = vmax.xlane.f32.xlu0 %v962
  %v995 = vpop.xlane.xlu0 %994
  %996 = vmax.xlane.f32.xlu0 %v963
  %v997 = vpop.xlane.xlu0 %996
  %998 = vmax.xlane.f32.xlu0 %v964
  %v999 = vpop.xlane.xlu0 %998
  %1000 = vmax.xlane.f32.xlu0 %v965
  %v1001 = vpop.xlane.xlu0 %1000
  %1002 = vmax.xlane.f32.xlu0 %v966
  %v1003 = vpop.xlane.xlu0 %1002
  %1004 = vmax.xlane.f32.xlu0 %v967
  %v1005 = vpop.xlane.xlu0 %1004
  %1006 = vmax.xlane.f32.xlu0 %v968
  %v1007 = vpop.xlane.xlu0 %1006
  %1008 = vmax.xlane.f32.xlu0 %v969
  %v1009 = vpop.xlane.xlu0 %1008
  %1010 = vmax.xlane.f32.xlu0 %v970
  %v1011 = vpop.xlane.xlu0 %1010
  %1012 = vmax.xlane.f32.xlu0 %v971
  %v1013 = vpop.xlane.xlu0 %1012
  %1014 = vmax.xlane.f32.xlu0 %v972
  %v1015 = vpop.xlane.xlu0 %1014
  %1016 = vmax.xlane.f32.xlu0 %v973
  %v1017 = vpop.xlane.xlu0 %1016
  %1018 = vmax.xlane.f32.xlu0 %v974
  %v1019 = vpop.xlane.xlu0 %1018
  %1020 = vmax.xlane.f32.xlu0 %v975
  %v1021 = vpop.xlane.xlu0 %1020
  %1022 = vmax.xlane.f32.xlu0 %v976
  %v1023 = vpop.xlane.xlu0 %1022
  %1024 = vmax.xlane.f32.xlu0 %v977
  %v1025 = vpop.xlane.xlu0 %1024
  %1026 = vmax.xlane.f32.xlu0 %v978
  %v1027 = vpop.xlane.xlu0 %1026
  %1028 = vmax.xlane.f32.xlu0 %v979
  %v1029 = vpop.xlane.xlu0 %1028
  %1030 = vmax.xlane.f32.xlu0 %v980
  %v1031 = vpop.xlane.xlu0 %1030
  %1032 = vmax.xlane.f32.xlu0 %v981
  %v1033 = vpop.xlane.xlu0 %1032
  %1034 = vmax.xlane.f32.xlu0 %v982
  %v1035 = vpop.xlane.xlu0 %1034
  %1036 = vmax.xlane.f32.xlu0 %v983
  %v1037 = vpop.xlane.xlu0 %1036
  %1038 = vmax.xlane.f32.xlu0 %v984
  %v1039 = vpop.xlane.xlu0 %1038
  %1040 = vmax.xlane.f32.xlu0 %v985
  %v1041 = vpop.xlane.xlu0 %1040
  %1042 = vmax.xlane.f32.xlu0 %v986
  %v1043 = vpop.xlane.xlu0 %1042
  %1044 = vmax.xlane.f32.xlu0 %v987
  %v1045 = vpop.xlane.xlu0 %1044
  %1046 = vmax.xlane.f32.xlu0 %v988
  %v1047 = vpop.xlane.xlu0 %1046
  %1048 = vmax.xlane.f32.xlu0 %v989
  %v1049 = vpop.xlane.xlu0 %1048
  %1050 = vmax.xlane.f32.xlu0 %v990
  %v1051 = vpop.xlane.xlu0 %1050
  %1052 = vmax.xlane.f32.xlu0 %v991
  %v1053 = vpop.xlane.xlu0 %1052
  %1054 = vmax.xlane.f32.xlu0 %v992
  %v1055 = vpop.xlane.xlu0 %1054
  %1056 = vmax.xlane.f32.xlu0 %v993
  %v1057 = vpop.xlane.xlu0 %1056
  %v1058 = vsub.f32 %v962, %v995
  %v1059 = vsub.f32 %v963, %v997
  %v1060 = vsub.f32 %v964, %v999
  %v1061 = vsub.f32 %v965, %v1001
  %v1062 = vsub.f32 %v966, %v1003
  %v1063 = vsub.f32 %v967, %v1005
  %v1064 = vsub.f32 %v968, %v1007
  %v1065 = vsub.f32 %v969, %v1009
  %v1066 = vsub.f32 %v970, %v1011
  %v1067 = vsub.f32 %v971, %v1013
  %v1068 = vsub.f32 %v972, %v1015
  %v1069 = vsub.f32 %v973, %v1017
  %v1070 = vsub.f32 %v974, %v1019
  %v1071 = vsub.f32 %v975, %v1021
  %v1072 = vsub.f32 %v976, %v1023
  %v1073 = vsub.f32 %v977, %v1025
  %v1074 = vsub.f32 %v978, %v1027
  %v1075 = vsub.f32 %v979, %v1029
  %v1076 = vsub.f32 %v980, %v1031
  %v1077 = vsub.f32 %v981, %v1033
  %v1078 = vsub.f32 %v982, %v1035
  %v1079 = vsub.f32 %v983, %v1037
  %v1080 = vsub.f32 %v984, %v1039
  %v1081 = vsub.f32 %v985, %v1041
  %v1082 = vsub.f32 %v986, %v1043
  %v1083 = vsub.f32 %v987, %v1045
  %v1084 = vsub.f32 %v988, %v1047
  %v1085 = vsub.f32 %v989, %v1049
  %v1086 = vsub.f32 %v990, %v1051
  %v1087 = vsub.f32 %v991, %v1053
  %v1088 = vsub.f32 %v992, %v1055
  %v1089 = vsub.f32 %v993, %v1057
  %v1090 = vmul.f32 %v1058, 1.442695
  %v1091 = vpow.pop %v1090
  %v1092 = vmul.f32 %v1059, 1.442695
  %v1093 = vpow.pop %v1092
  %v1094 = vmul.f32 %v1060, 1.442695
  %v1095 = vpow.pop %v1094
  %v1096 = vmul.f32 %v1061, 1.442695
  %v1097 = vpow.pop %v1096
  %v1098 = vmul.f32 %v1062, 1.442695
  %v1099 = vpow.pop %v1098
  %v1100 = vmul.f32 %v1063, 1.442695
  %v1101 = vpow.pop %v1100
  %v1102 = vmul.f32 %v1064, 1.442695
  %v1103 = vpow.pop %v1102
  %v1104 = vmul.f32 %v1065, 1.442695
  %v1105 = vpow.pop %v1104
  %v1106 = vmul.f32 %v1066, 1.442695
  %v1107 = vpow.pop %v1106
  %v1108 = vmul.f32 %v1067, 1.442695
  %v1109 = vpow.pop %v1108
  %v1110 = vmul.f32 %v1068, 1.442695
  %v1111 = vpow.pop %v1110
  %v1112 = vmul.f32 %v1069, 1.442695
  %v1113 = vpow.pop %v1112
  %v1114 = vmul.f32 %v1070, 1.442695
  %v1115 = vpow.pop %v1114
  %v1116 = vmul.f32 %v1071, 1.442695
  %v1117 = vpow.pop %v1116
  %v1118 = vmul.f32 %v1072, 1.442695
  %v1119 = vpow.pop %v1118
  %v1120 = vmul.f32 %v1073, 1.442695
  %v1121 = vpow.pop %v1120
  %v1122 = vmul.f32 %v1074, 1.442695
  %v1123 = vpow.pop %v1122
  %v1124 = vmul.f32 %v1075, 1.442695
  %v1125 = vpow.pop %v1124
  %v1126 = vmul.f32 %v1076, 1.442695
  %v1127 = vpow.pop %v1126
  %v1128 = vmul.f32 %v1077, 1.442695
  %v1129 = vpow.pop %v1128
  %v1130 = vmul.f32 %v1078, 1.442695
  %v1131 = vpow.pop %v1130
  %v1132 = vmul.f32 %v1079, 1.442695
  %v1133 = vpow.pop %v1132
  %v1134 = vmul.f32 %v1080, 1.442695
  %v1135 = vpow.pop %v1134
  %v1136 = vmul.f32 %v1081, 1.442695
  %v1137 = vpow.pop %v1136
  %v1138 = vmul.f32 %v1082, 1.442695
  %v1139 = vpow.pop %v1138
  %v1140 = vmul.f32 %v1083, 1.442695
  %v1141 = vpow.pop %v1140
  %v1142 = vmul.f32 %v1084, 1.442695
  %v1143 = vpow.pop %v1142
  %v1144 = vmul.f32 %v1085, 1.442695
  %v1145 = vpow.pop %v1144
  %v1146 = vmul.f32 %v1086, 1.442695
  %v1147 = vpow.pop %v1146
  %v1148 = vmul.f32 %v1087, 1.442695
  %v1149 = vpow.pop %v1148
  %v1150 = vmul.f32 %v1088, 1.442695
  %v1151 = vpow.pop %v1150
  %v1152 = vmul.f32 %v1089, 1.442695
  %v1153 = vpow.pop %v1152
  %1154 = vadd.xlane.f32.xlu0 %v1091
  %v1155 = vpop.xlane.xlu0 %1154
  %1156 = vadd.xlane.f32.xlu0 %v1093
  %v1157 = vpop.xlane.xlu0 %1156
  %1158 = vadd.xlane.f32.xlu0 %v1095
  %v1159 = vpop.xlane.xlu0 %1158
  %1160 = vadd.xlane.f32.xlu0 %v1097
  %v1161 = vpop.xlane.xlu0 %1160
  %1162 = vadd.xlane.f32.xlu0 %v1099
  %v1163 = vpop.xlane.xlu0 %1162
  %1164 = vadd.xlane.f32.xlu0 %v1101
  %v1165 = vpop.xlane.xlu0 %1164
  %1166 = vadd.xlane.f32.xlu0 %v1103
  %v1167 = vpop.xlane.xlu0 %1166
  %1168 = vadd.xlane.f32.xlu0 %v1105
  %v1169 = vpop.xlane.xlu0 %1168
  %1170 = vadd.xlane.f32.xlu0 %v1107
  %v1171 = vpop.xlane.xlu0 %1170
  %1172 = vadd.xlane.f32.xlu0 %v1109
  %v1173 = vpop.xlane.xlu0 %1172
  %1174 = vadd.xlane.f32.xlu0 %v1111
  %v1175 = vpop.xlane.xlu0 %1174
  %1176 = vadd.xlane.f32.xlu0 %v1113
  %v1177 = vpop.xlane.xlu0 %1176
  %1178 = vadd.xlane.f32.xlu0 %v1115
  %v1179 = vpop.xlane.xlu0 %1178
  %1180 = vadd.xlane.f32.xlu0 %v1117
  %v1181 = vpop.xlane.xlu0 %1180
  %1182 = vadd.xlane.f32.xlu0 %v1119
  %v1183 = vpop.xlane.xlu0 %1182
  %1184 = vadd.xlane.f32.xlu0 %v1121
  %v1185 = vpop.xlane.xlu0 %1184
  %1186 = vadd.xlane.f32.xlu0 %v1123
  %v1187 = vpop.xlane.xlu0 %1186
  %1188 = vadd.xlane.f32.xlu0 %v1125
  %v1189 = vpop.xlane.xlu0 %1188
  %1190 = vadd.xlane.f32.xlu0 %v1127
  %v1191 = vpop.xlane.xlu0 %1190
  %1192 = vadd.xlane.f32.xlu0 %v1129
  %v1193 = vpop.xlane.xlu0 %1192
  %1194 = vadd.xlane.f32.xlu0 %v1131
  %v1195 = vpop.xlane.xlu0 %1194
  %1196 = vadd.xlane.f32.xlu0 %v1133
  %v1197 = vpop.xlane.xlu0 %1196
  %1198 = vadd.xlane.f32.xlu0 %v1135
  %v1199 = vpop.xlane.xlu0 %1198
  %1200 = vadd.xlane.f32.xlu0 %v1137
  %v1201 = vpop.xlane.xlu0 %1200
  %1202 = vadd.xlane.f32.xlu0 %v1139
  %v1203 = vpop.xlane.xlu0 %1202
  %1204 = vadd.xlane.f32.xlu0 %v1141
  %v1205 = vpop.xlane.xlu0 %1204
  %1206 = vadd.xlane.f32.xlu0 %v1143
  %v1207 = vpop.xlane.xlu0 %1206
  %1208 = vadd.xlane.f32.xlu0 %v1145
  %v1209 = vpop.xlane.xlu0 %1208
  %1210 = vadd.xlane.f32.xlu0 %v1147
  %v1211 = vpop.xlane.xlu0 %1210
  %1212 = vadd.xlane.f32.xlu0 %v1149
  %v1213 = vpop.xlane.xlu0 %1212
  %1214 = vadd.xlane.f32.xlu0 %v1151
  %v1215 = vpop.xlane.xlu0 %1214
  %1216 = vadd.xlane.f32.xlu0 %v1153
  %v1217 = vpop.xlane.xlu0 %1216
  %v1218 = vrcp.pop %v1155
  %v1219 = vrcp.pop %v1157
  %v1220 = vrcp.pop %v1159
  %v1221 = vrcp.pop %v1161
  %v1222 = vrcp.pop %v1163
  %v1223 = vrcp.pop %v1165
  %v1224 = vrcp.pop %v1167
  %v1225 = vrcp.pop %v1169
  %v1226 = vrcp.pop %v1171
  %v1227 = vrcp.pop %v1173
  %v1228 = vrcp.pop %v1175
  %v1229 = vrcp.pop %v1177
  %v1230 = vrcp.pop %v1179
  %v1231 = vrcp.pop %v1181
  %v1232 = vrcp.pop %v1183
  %v1233 = vrcp.pop %v1185
  %v1234 = vrcp.pop %v1187
  %v1235 = vrcp.pop %v1189
  %v1236 = vrcp.pop %v1191
  %v1237 = vrcp.pop %v1193
  %v1238 = vrcp.pop %v1195
  %v1239 = vrcp.pop %v1197
  %v1240 = vrcp.pop %v1199
  %v1241 = vrcp.pop %v1201
  %v1242 = vrcp.pop %v1203
  %v1243 = vrcp.pop %v1205
  %v1244 = vrcp.pop %v1207
  %v1245 = vrcp.pop %v1209
  %v1246 = vrcp.pop %v1211
  %v1247 = vrcp.pop %v1213
  %v1248 = vrcp.pop %v1215
  %v1249 = vrcp.pop %v1217
  %v1250 = vmul.f32 %v1155, %v1218
  %v1251 = vmul.f32 %v1157, %v1219
  %v1252 = vmul.f32 %v1159, %v1220
  %v1253 = vmul.f32 %v1161, %v1221
  %v1254 = vmul.f32 %v1163, %v1222
  %v1255 = vmul.f32 %v1165, %v1223
  %v1256 = vmul.f32 %v1167, %v1224
  %v1257 = vmul.f32 %v1169, %v1225
  %v1258 = vmul.f32 %v1171, %v1226
  %v1259 = vmul.f32 %v1173, %v1227
  %v1260 = vmul.f32 %v1175, %v1228
  %v1261 = vmul.f32 %v1177, %v1229
  %v1262 = vmul.f32 %v1179, %v1230
  %v1263 = vmul.f32 %v1181, %v1231
  %v1264 = vmul.f32 %v1183, %v1232
  %v1265 = vmul.f32 %v1185, %v1233
  %v1266 = vmul.f32 %v1187, %v1234
  %v1267 = vmul.f32 %v1189, %v1235
  %v1268 = vmul.f32 %v1191, %v1236
  %v1269 = vmul.f32 %v1193, %v1237
  %v1270 = vmul.f32 %v1195, %v1238
  %v1271 = vmul.f32 %v1197, %v1239
  %v1272 = vmul.f32 %v1199, %v1240
  %v1273 = vmul.f32 %v1201, %v1241
  %v1274 = vmul.f32 %v1203, %v1242
  %v1275 = vmul.f32 %v1205, %v1243
  %v1276 = vmul.f32 %v1207, %v1244
  %v1277 = vmul.f32 %v1209, %v1245
  %v1278 = vmul.f32 %v1211, %v1246
  %v1279 = vmul.f32 %v1213, %v1247
  %v1280 = vmul.f32 %v1215, %v1248
  %v1281 = vmul.f32 %v1217, %v1249
  %v1282 = vsub.f32 2.0, %v1250
  %v1283 = vsub.f32 2.0, %v1251
  %v1284 = vsub.f32 2.0, %v1252
  %v1285 = vsub.f32 2.0, %v1253
  %v1286 = vsub.f32 2.0, %v1254
  %v1287 = vsub.f32 2.0, %v1255
  %v1288 = vsub.f32 2.0, %v1256
  %v1289 = vsub.f32 2.0, %v1257
  %v1290 = vsub.f32 2.0, %v1258
  %v1291 = vsub.f32 2.0, %v1259
  %v1292 = vsub.f32 2.0, %v1260
  %v1293 = vsub.f32 2.0, %v1261
  %v1294 = vsub.f32 2.0, %v1262
  %v1295 = vsub.f32 2.0, %v1263
  %v1296 = vsub.f32 2.0, %v1264
  %v1297 = vsub.f32 2.0, %v1265
  %v1298 = vsub.f32 2.0, %v1266
  %v1299 = vsub.f32 2.0, %v1267
  %v1300 = vsub.f32 2.0, %v1268
  %v1301 = vsub.f32 2.0, %v1269
  %v1302 = vsub.f32 2.0, %v1270
  %v1303 = vsub.f32 2.0, %v1271
  %v1304 = vsub.f32 2.0, %v1272
  %v1305 = vsub.f32 2.0, %v1273
  %v1306 = vsub.f32 2.0, %v1274
  %v1307 = vsub.f32 2.0, %v1275
  %v1308 = vsub.f32 2.0, %v1276
  %v1309 = vsub.f32 2.0, %v1277
  %v1310 = vsub.f32 2.0, %v1278
  %v1311 = vsub.f32 2.0, %v1279
  %v1312 = vsub.f32 2.0, %v1280
  %v1313 = vsub.f32 2.0, %v1281
  %v1314 = vmul.f32 %v1218, %v1282
  %v1315 = vmul.f32 %v1219, %v1283
  %v1316 = vmul.f32 %v1220, %v1284
  %v1317 = vmul.f32 %v1221, %v1285
  %v1318 = vmul.f32 %v1222, %v1286
  %v1319 = vmul.f32 %v1223, %v1287
  %v1320 = vmul.f32 %v1224, %v1288
  %v1321 = vmul.f32 %v1225, %v1289
  %v1322 = vmul.f32 %v1226, %v1290
  %v1323 = vmul.f32 %v1227, %v1291
  %v1324 = vmul.f32 %v1228, %v1292
  %v1325 = vmul.f32 %v1229, %v1293
  %v1326 = vmul.f32 %v1230, %v1294
  %v1327 = vmul.f32 %v1231, %v1295
  %v1328 = vmul.f32 %v1232, %v1296
  %v1329 = vmul.f32 %v1233, %v1297
  %v1330 = vmul.f32 %v1234, %v1298
  %v1331 = vmul.f32 %v1235, %v1299
  %v1332 = vmul.f32 %v1236, %v1300
  %v1333 = vmul.f32 %v1237, %v1301
  %v1334 = vmul.f32 %v1238, %v1302
  %v1335 = vmul.f32 %v1239, %v1303
  %v1336 = vmul.f32 %v1240, %v1304
  %v1337 = vmul.f32 %v1241, %v1305
  %v1338 = vmul.f32 %v1242, %v1306
  %v1339 = vmul.f32 %v1243, %v1307
  %v1340 = vmul.f32 %v1244, %v1308
  %v1341 = vmul.f32 %v1245, %v1309
  %v1342 = vmul.f32 %v1246, %v1310
  %v1343 = vmul.f32 %v1247, %v1311
  %v1344 = vmul.f32 %v1248, %v1312
  %v1345 = vmul.f32 %v1249, %v1313
  %v1346 = vmul.f32 %v1091, %v1314
  %v1347 = vmul.f32 %v1093, %v1315
  %v1348 = vmul.f32 %v1095, %v1316
  %v1349 = vmul.f32 %v1097, %v1317
  %v1350 = vmul.f32 %v1099, %v1318
  %v1351 = vmul.f32 %v1101, %v1319
  %v1352 = vmul.f32 %v1103, %v1320
  %v1353 = vmul.f32 %v1105, %v1321
  %v1354 = vmul.f32 %v1107, %v1322
  %v1355 = vmul.f32 %v1109, %v1323
  %v1356 = vmul.f32 %v1111, %v1324
  %v1357 = vmul.f32 %v1113, %v1325
  %v1358 = vmul.f32 %v1115, %v1326
  %v1359 = vmul.f32 %v1117, %v1327
  %v1360 = vmul.f32 %v1119, %v1328
  %v1361 = vmul.f32 %v1121, %v1329
  %v1362 = vmul.f32 %v1123, %v1330
  %v1363 = vmul.f32 %v1125, %v1331
  %v1364 = vmul.f32 %v1127, %v1332
  %v1365 = vmul.f32 %v1129, %v1333
  %v1366 = vmul.f32 %v1131, %v1334
  %v1367 = vmul.f32 %v1133, %v1335
  %v1368 = vmul.f32 %v1135, %v1336
  %v1369 = vmul.f32 %v1137, %v1337
  %v1370 = vmul.f32 %v1139, %v1338
  %v1371 = vmul.f32 %v1141, %v1339
  %v1372 = vmul.f32 %v1143, %v1340
  %v1373 = vmul.f32 %v1145, %v1341
  %v1374 = vmul.f32 %v1147, %v1342
  %v1375 = vmul.f32 %v1149, %v1343
  %v1376 = vmul.f32 %v1151, %v1344
  %v1377 = vmul.f32 %v1153, %v1345
  %vm1378 = vcmp.eq.s32.totalorder %v960, 8
  %v1379 = vsel %vm1378, %v880, 0.0
  %v1380 = vsel %vm1378, %v882, 0.0
  %v1381 = vsel %vm1378, %v885, 0.0
  %v1382 = vsel %vm1378, %v887, 0.0
  %v1383 = vsel %vm1378, %v890, 0.0
  %v1384 = vsel %vm1378, %v892, 0.0
  %v1385 = vsel %vm1378, %v895, 0.0
  %v1386 = vsel %vm1378, %v897, 0.0
  %v1387 = vsel %vm1378, %v900, 0.0
  %v1388 = vsel %vm1378, %v902, 0.0
  %v1389 = vsel %vm1378, %v905, 0.0
  %v1390 = vsel %vm1378, %v907, 0.0
  %v1391 = vsel %vm1378, %v910, 0.0
  %v1392 = vsel %vm1378, %v912, 0.0
  %v1393 = vsel %vm1378, %v915, 0.0
  %v1394 = vsel %vm1378, %v917, 0.0
  %v1395 = vsel %vm1378, %v920, 0.0
  %v1396 = vsel %vm1378, %v922, 0.0
  %v1397 = vsel %vm1378, %v925, 0.0
  %v1398 = vsel %vm1378, %v927, 0.0
  %v1399 = vsel %vm1378, %v930, 0.0
  %v1400 = vsel %vm1378, %v932, 0.0
  %v1401 = vsel %vm1378, %v935, 0.0
  %v1402 = vsel %vm1378, %v937, 0.0
  %v1403 = vsel %vm1378, %v940, 0.0
  %v1404 = vsel %vm1378, %v942, 0.0
  %v1405 = vsel %vm1378, %v945, 0.0
  %v1406 = vsel %vm1378, %v947, 0.0
  %v1407 = vsel %vm1378, %v950, 0.0
  %v1408 = vsel %vm1378, %v952, 0.0
  %v1409 = vsel %vm1378, %v955, 0.0
  %v1410 = vsel %vm1378, %v957, 0.0
  %v1411 = vadd.f32 %v1346, %v1379
  %v1412 = vadd.f32 %v1347, %v1380
  %v1413 = vadd.f32 %v1348, %v1381
  %v1414 = vadd.f32 %v1349, %v1382
  %v1415 = vadd.f32 %v1350, %v1383
  %v1416 = vadd.f32 %v1351, %v1384
  %v1417 = vadd.f32 %v1352, %v1385
  %v1418 = vadd.f32 %v1353, %v1386
  %v1419 = vadd.f32 %v1354, %v1387
  %v1420 = vadd.f32 %v1355, %v1388
  %v1421 = vadd.f32 %v1356, %v1389
  %v1422 = vadd.f32 %v1357, %v1390
  %v1423 = vadd.f32 %v1358, %v1391
  %v1424 = vadd.f32 %v1359, %v1392
  %v1425 = vadd.f32 %v1360, %v1393
  %v1426 = vadd.f32 %v1361, %v1394
  %v1427 = vadd.f32 %v1362, %v1395
  %v1428 = vadd.f32 %v1363, %v1396
  %v1429 = vadd.f32 %v1364, %v1397
  %v1430 = vadd.f32 %v1365, %v1398
  %v1431 = vadd.f32 %v1366, %v1399
  %v1432 = vadd.f32 %v1367, %v1400
  %v1433 = vadd.f32 %v1368, %v1401
  %v1434 = vadd.f32 %v1369, %v1402
  %v1435 = vadd.f32 %v1370, %v1403
  %v1436 = vadd.f32 %v1371, %v1404
  %v1437 = vadd.f32 %v1372, %v1405
  %v1438 = vadd.f32 %v1373, %v1406
  %v1439 = vadd.f32 %v1374, %v1407
  %v1440 = vadd.f32 %v1375, %v1408
  %v1441 = vadd.f32 %v1376, %v1409
  %v1442 = vadd.f32 %v1377, %v1410
  %1443 = vst [vmem:[%s7] sm:$0xff] %v1411
  %1444 = vst [vmem:[%s7 + $0x8] sm:$0xff] %v1412
  %1445 = vst [vmem:[%s7 + $0x10] sm:$0xff] %v1413
  %1446 = vst [vmem:[%s7 + $0x18] sm:$0xff] %v1414
  %1447 = vst [vmem:[%s7 + $0x20] sm:$0xff] %v1415
  %1448 = vst [vmem:[%s7 + $0x28] sm:$0xff] %v1416
  %1449 = vst [vmem:[%s7 + $0x30] sm:$0xff] %v1417
  %1450 = vst [vmem:[%s7 + $0x38] sm:$0xff] %v1418
  %1451 = vst [vmem:[%s7 + $0x40] sm:$0xff] %v1419
  %1452 = vst [vmem:[%s7 + $0x48] sm:$0xff] %v1420
  %1453 = vst [vmem:[%s7 + $0x50] sm:$0xff] %v1421
  %1454 = vst [vmem:[%s7 + $0x58] sm:$0xff] %v1422
  %1455 = vst [vmem:[%s7 + $0x60] sm:$0xff] %v1423
  %1456 = vst [vmem:[%s7 + $0x68] sm:$0xff] %v1424
  %1457 = vst [vmem:[%s7 + $0x70] sm:$0xff] %v1425
  %1458 = vst [vmem:[%s7 + $0x78] sm:$0xff] %v1426
  %1459 = vst [vmem:[%s7 + $0x80] sm:$0xff] %v1427
  %1460 = vst [vmem:[%s7 + $0x88] sm:$0xff] %v1428
  %1461 = vst [vmem:[%s7 + $0x90] sm:$0xff] %v1429
  %1462 = vst [vmem:[%s7 + $0x98] sm:$0xff] %v1430
  %1463 = vst [vmem:[%s7 + $0xa0] sm:$0xff] %v1431
  %1464 = vst [vmem:[%s7 + $0xa8] sm:$0xff] %v1432
  %1465 = vst [vmem:[%s7 + $0xb0] sm:$0xff] %v1433
  %1466 = vst [vmem:[%s7 + $0xb8] sm:$0xff] %v1434
  %1467 = vst [vmem:[%s7 + $0xc0] sm:$0xff] %v1435
  %1468 = vst [vmem:[%s7 + $0xc8] sm:$0xff] %v1436
  %1469 = vst [vmem:[%s7 + $0xd0] sm:$0xff] %v1437
  %1470 = vst [vmem:[%s7 + $0xd8] sm:$0xff] %v1438
  %1471 = vst [vmem:[%s7 + $0xe0] sm:$0xff] %v1439
  %1472 = vst [vmem:[%s7 + $0xe8] sm:$0xff] %v1440
  %1473 = vst [vmem:[%s7 + $0xf0] sm:$0xff] %v1441
  %1474 = vst [vmem:[%s7 + $0xf8] sm:$0xff] %v1442
  // Predicated region
  $region30: #{a3c_forward.1} parent=0 // pred_check
    _
  $region31: #{a3c_forward.1} parent=0 // pred_check_branch
    %1476 = sbr.rel (0) target = $region33
  $region32: #{a3c_forward.1} parent=0 // pred_region
    _
  $region33: #{a3c_forward.1} parent=0 // pred_fallthru
    _
  // Predicated region
  $region34: #{a3c_forward.1} parent=0 // pred_check
    _
  $region35: #{a3c_forward.1} parent=0 // pred_check_branch
    %1478 = sbr.rel (0) target = $region37
  $region36: #{a3c_forward.1} parent=0 // pred_region
    _
  $region37: #{a3c_forward.1} parent=0 // pred_fallthru
    _

</llo_original>
